<compile_context>
chip_gen: v7x
topology: tpu7x:2x2x1
jax: 0.10.0
libtpu: 0.0.40
codegen_flags: <defaults>
</compile_context>

<pallas_src>
import jax
import jax.numpy as jnp
from jax.experimental import pallas as pl
from jax.experimental.pallas import tpu as pltpu

EPS = 1e-3


def fused_cat_conv_bn_relu_kernel(x_ref, w_ref, gamma_ref, beta_ref, o_ref):
    # concat + 1x1 conv as a single MXU matmul in (Cout, M) layout:
    #   (tile_cout, Cin) @ (Cin, M) -> (tile_cout, M)
    y = jnp.dot(w_ref[...], x_ref[...], preferred_element_type=jnp.float32)

    # BatchNorm2d training semantics: per-channel (per-row) batch mean and
    # biased variance.  One-pass var = E[y^2] - mean^2 (fine here: values are
    # O(1), 196 samples, f32 accumulation).
    m = y.shape[1]
    inv_m = jnp.float32(1.0 / m)
    mean = jnp.sum(y, axis=1, keepdims=True) * inv_m
    var = jnp.sum(y * y, axis=1, keepdims=True) * inv_m - mean * mean

    # Fold BN affine into per-channel scale/shift (rsqrt runs on the EUP).
    scale = gamma_ref[...] * jax.lax.rsqrt(var + EPS)
    shift = beta_ref[...] - mean * scale

    # ReLU fused in.
    o_ref[...] = jnp.maximum(y * scale + shift, 0.0)


def fused_forward(xs_nchw, weight, gamma, beta, *, cout_tiles=2):
    """xs_nchw: list of 4 NCHW float32 arrays (N=1, same H,W).
    weight: PyTorch Conv2d weight (Cout, Cin, 1, 1) with Cin = sum of channels.
    gamma, beta: BatchNorm affine parameters, shape (Cout,).
    Returns NCHW output of shape (1, Cout, H, W)."""
    N, _, H, W = xs_nchw[0].shape
    assert N == 1, "layout trick (free NCHW<->(C,HW) reshape) assumes N == 1"
    M = H * W
    Cout, Cin = weight.shape[0], weight.shape[1]
    assert sum(x.shape[1] for x in xs_nchw) == Cin
    assert Cout % cout_tiles == 0
    tile = Cout // cout_tiles

    # (1,C,H,W) -> (C, H*W) is a free view; concat along channels -> (Cin, M).
    x_cat = jnp.concatenate([x.reshape(x.shape[1], M) for x in xs_nchw], axis=0)

    # Conv weight (Cout, Cin, 1, 1) -> (Cout, Cin); no transpose needed for
    # the W @ X formulation.
    w2d = weight.reshape(Cout, Cin)
    gamma2 = gamma.reshape(Cout, 1)
    beta2 = beta.reshape(Cout, 1)

    cost = pl.CostEstimate(
        flops=2 * M * Cin * Cout,
        transcendentals=Cout,                       # rsqrt per channel
        bytes_accessed=4 * (Cin * M + Cout * Cin + 2 * Cout + Cout * M),
    )

    out = pl.pallas_call(
        fused_cat_conv_bn_relu_kernel,
        out_shape=jax.ShapeDtypeStruct((Cout, M), jnp.float32),
        grid=(cout_tiles,),
        in_specs=[
            pl.BlockSpec((Cin, M), lambda i: (0, 0)),      # X resident across tiles
            pl.BlockSpec((tile, Cin), lambda i: (i, 0)),   # weight rows per tile
            pl.BlockSpec((tile, 1), lambda i: (i, 0)),     # gamma per tile
            pl.BlockSpec((tile, 1), lambda i: (i, 0)),     # beta per tile
        ],
        out_specs=pl.BlockSpec((tile, M), lambda i: (i, 0)),
        compiler_params=pltpu.CompilerParams(
            dimension_semantics=("parallel",)),
        cost_estimate=cost,
    )(x_cat, w2d, gamma2, beta2)

    # (Cout, M) -> (1, Cout, H, W) is a free view back to NCHW.
    return out.reshape(1, Cout, H, W)


def reference_forward(xs_nchw, weight, gamma, beta):
    # Pure-JAX reference mirroring the PyTorch module's forward.
    x = jnp.concatenate(xs_nchw, axis=1)                      # (1, 528, H, W)
    w2d = weight.reshape(weight.shape[0], weight.shape[1])    # (Cout, Cin)
    y = jnp.einsum("nchw,oc->nohw", x, w2d,
                   preferred_element_type=jnp.float32,
                   precision=jax.lax.Precision.HIGHEST)       # 1x1 conv
    mean = jnp.mean(y, axis=(0, 2, 3), keepdims=True)
    var = jnp.mean((y - mean) ** 2, axis=(0, 2, 3), keepdims=True)
    y_hat = (y - mean) * jax.lax.rsqrt(var + EPS)
    out = y_hat * gamma.reshape(1, -1, 1, 1) + beta.reshape(1, -1, 1, 1)
    return jnp.maximum(out, 0.0)


if __name__ == "__main__":
    key = jax.random.PRNGKey(0)
    ks = jax.random.split(key, 7)

    # Shapes fixed by the module (Conv2d(528, 256, 1x1), N=1, 14x14 spatial).
    x128 = jax.random.normal(ks[0], (1, 112, 14, 14), jnp.float32)
    x134 = jax.random.normal(ks[1], (1, 288, 14, 14), jnp.float32)
    x140 = jax.random.normal(ks[2], (1, 64, 14, 14), jnp.float32)
    x144 = jax.random.normal(ks[3], (1, 64, 14, 14), jnp.float32)

    # Deterministic parameters (Conv2d bias=False; BN affine gamma/beta).
    weight = jax.random.normal(ks[4], (256, 528, 1, 1), jnp.float32) * 0.05
    gamma = 1.0 + 0.1 * jax.random.normal(ks[5], (256,), jnp.float32)
    beta = 0.1 * jax.random.normal(ks[6], (256,), jnp.float32)

    # TODO(synk): BatchNorm2d running_mean/running_var updates (training-mode
    # side effect) are not produced; only the forward tensor is computed.

    xs = [x128, x134, x140, x144]
    out = jax.block_until_ready(fused_forward(xs, weight, gamma, beta))
    assert out.shape == (1, 256, 14, 14), out.shape

    ref = jax.block_until_ready(reference_forward(xs, weight, gamma, beta))
    assert jnp.allclose(out, ref, atol=1e-3, rtol=1e-3)

    print("KERNEL_OK")
</pallas_src>

<mosaic_0001>
module attributes {stable_mosaic.version = 11 : i64} {
  func.func @fused_cat_conv_bn_relu_kernel(%arg0: i32, %arg1: memref<528x196xf32, #tpu.memory_space<vmem>>, %arg2: memref<128x528xf32, #tpu.memory_space<vmem>>, %arg3: memref<128x1xf32, #tpu.memory_space<vmem>>, %arg4: memref<128x1xf32, #tpu.memory_space<vmem>>, %arg5: memref<128x196xf32, #tpu.memory_space<vmem>>) attributes {dimension_semantics = [#tpu.dimension_semantics<parallel>], iteration_bounds = array<i64: 2>, scalar_prefetch = 0 : i64, scratch_operands = 0 : i64, tpu.core_type = #tpu.core_type<tc>, window_params = [{pipeline_mode = #tpu.pipeline_mode<synchronous>, transform_indices = @transform_0, window_bounds = array<i64: 528, 196>}, {transform_indices = @transform_1, window_bounds = array<i64: 128, 528>}, {transform_indices = @transform_2, window_bounds = array<i64: 128, 1>}, {transform_indices = @transform_3, window_bounds = array<i64: 128, 1>}, {transform_indices = @transform_4, window_bounds = array<i64: 128, 196>}]} {
    %c0 = arith.constant 0 : index
    %c0_0 = arith.constant 0 : index
    %0 = vector.load %arg2[%c0, %c0_0] : memref<128x528xf32, #tpu.memory_space<vmem>>, vector<128x528xf32>
    %c0_1 = arith.constant 0 : index
    %c0_2 = arith.constant 0 : index
    %1 = vector.load %arg1[%c0_1, %c0_2] : memref<528x196xf32, #tpu.memory_space<vmem>>, vector<528x196xf32>
    %cst = arith.constant dense<0.000000e+00> : vector<128x196xf32>
    %2 = tpu.matmul %0, %1, %cst {dimension_numbers = #tpu.dot_dimension_numbers<[1], [0], [0], [1], [0, 0, 1, 1], [], []>} : vector<128x528xf32>, vector<528x196xf32>, vector<128x196xf32> -> vector<128x196xf32>
    %cst_3 = arith.constant dense<0.000000e+00> : vector<128xf32>
    %3 = vector.multi_reduction <add>, %2, %cst_3 [1] : vector<128x196xf32> to vector<128xf32>
    %4 = vector.shape_cast %3 : vector<128xf32> to vector<128x1xf32>
    %cst_4 = arith.constant 0.00510204071 : f32
    %5 = vector.broadcast %cst_4 : f32 to vector<128x1xf32>
    %6 = arith.mulf %4, %5 : vector<128x1xf32>
    %7 = arith.mulf %2, %2 : vector<128x196xf32>
    %cst_5 = arith.constant dense<0.000000e+00> : vector<128xf32>
    %8 = vector.multi_reduction <add>, %7, %cst_5 [1] : vector<128x196xf32> to vector<128xf32>
    %9 = vector.shape_cast %8 : vector<128xf32> to vector<128x1xf32>
    %cst_6 = arith.constant 0.00510204071 : f32
    %10 = vector.broadcast %cst_6 : f32 to vector<128x1xf32>
    %11 = arith.mulf %9, %10 : vector<128x1xf32>
    %12 = arith.mulf %6, %6 : vector<128x1xf32>
    %13 = arith.subf %11, %12 : vector<128x1xf32>
    %c0_7 = arith.constant 0 : index
    %c0_8 = arith.constant 0 : index
    %14 = vector.load %arg3[%c0_7, %c0_8] : memref<128x1xf32, #tpu.memory_space<vmem>>, vector<128x1xf32>
    %cst_9 = arith.constant 1.000000e-03 : f32
    %15 = vector.broadcast %cst_9 : f32 to vector<128x1xf32>
    %16 = arith.addf %13, %15 : vector<128x1xf32>
    %17 = math.rsqrt %16 : vector<128x1xf32>
    %18 = arith.mulf %14, %17 : vector<128x1xf32>
    %c0_10 = arith.constant 0 : index
    %c0_11 = arith.constant 0 : index
    %19 = vector.load %arg4[%c0_10, %c0_11] : memref<128x1xf32, #tpu.memory_space<vmem>>, vector<128x1xf32>
    %20 = arith.mulf %6, %18 : vector<128x1xf32>
    %21 = arith.subf %19, %20 : vector<128x1xf32>
    %22 = vector.broadcast %18 : vector<128x1xf32> to vector<128x196xf32>
    %23 = arith.mulf %2, %22 : vector<128x196xf32>
    %24 = vector.broadcast %21 : vector<128x1xf32> to vector<128x196xf32>
    %25 = arith.addf %23, %24 : vector<128x196xf32>
    %cst_12 = arith.constant 0.000000e+00 : f32
    %26 = vector.broadcast %cst_12 : f32 to vector<128x196xf32>
    %27 = arith.maximumf %25, %26 : vector<128x196xf32>
    %c0_13 = arith.constant 0 : index
    %c0_14 = arith.constant 0 : index
    %28 = vector.load %arg5[%c0_13, %c0_14] : memref<128x196xf32, #tpu.memory_space<vmem>>, vector<128x196xf32>
    tpu.vector_store %arg5[%c0_13, %c0_14], %27 {strides = array<i32>} : memref<128x196xf32, #tpu.memory_space<vmem>>, vector<128x196xf32>,
    return
  }
  func.func @transform_0(%arg0: i32) -> (i32, i32) {
    %c0_i32 = arith.constant 0 : i32
    %c0_i32_0 = arith.constant 0 : i32
    %c0_i32_1 = arith.constant 0 : i32
    return %c0_i32, %c0_i32_0 : i32, i32
  }
  func.func @transform_1(%arg0: i32) -> (i32, i32) {
    %c0_i32 = arith.constant 0 : i32
    %c0_i32_0 = arith.constant 0 : i32
    return %arg0, %c0_i32 : i32, i32
  }
  func.func @transform_2(%arg0: i32) -> (i32, i32) {
    %c0_i32 = arith.constant 0 : i32
    %c0_i32_0 = arith.constant 0 : i32
    return %arg0, %c0_i32 : i32, i32
  }
  func.func @transform_3(%arg0: i32) -> (i32, i32) {
    %c0_i32 = arith.constant 0 : i32
    %c0_i32_0 = arith.constant 0 : i32
    return %arg0, %c0_i32 : i32, i32
  }
  func.func @transform_4(%arg0: i32) -> (i32, i32) {
    %c0_i32 = arith.constant 0 : i32
    %c0_i32_0 = arith.constant 0 : i32
    return %arg0, %c0_i32 : i32, i32
  }
}

</mosaic_0001>

<llo_original>
// kernel: tpu_custom_call.1
$region0: #{tpu_custom_call.1}
  #allocation0 [shape = 'u32[]', space=smem, size = 0x4, offset = 0x4, fixed_abs, tag = 'smem constant byte address 0x4 - core index']
  #allocation1 [shape = 'u32[144,128]{1,0:T(1,128)}', space=vmem, size = 0x12000, scoped, tag = 'internal scratch']
  %s0 = inlined_call_operand.vmem [shape: f32[528,196], index: 0, kind: input, shape index: {}]
  %s1 = inlined_call_operand.vmem [shape: f32[256,528], index: 1, kind: input, shape index: {}]
  %s2 = inlined_call_operand.vmem [shape: f32[256,1], index: 2, kind: input, shape index: {}]
  %s3 = inlined_call_operand.vmem [shape: f32[256,1], index: 3, kind: input, shape index: {}]
  %s4 = inlined_call_operand.vmem [shape: f32[256,196], index: 4, kind: output, shape index: {}]
  %s5 = sld [smem:[#allocation0]]
  $region49: #{tpu_custom_call.1} parent=0
    _
  %s7 = ssub.s32 1, %s5
  %s8 = scalar_select 0, %s7, %s5
  loop: start=0, step=1, limit=4
  $region2: #{tpu_custom_call.1} parent=0 // loop_pre_header
    _
  $region3: #{tpu_custom_call.1} parent=0 // loop_header
    %s10 = sphi 0, %s14
    %p11 = scmp.ge.s32.totalorder %s10, 4
    %s18 = sphi 0, %s18
    %s20 = sphi 0, %s18
    %s21 = sphi 0, %s20
    %s35 = sphi 0, %s21
    %s41 = sphi 0, %s43
    %s44 = sphi 0, %s41
    %s45 = sphi 0, %s44
    %s61 = sphi 0, %s45
    %s67 = sphi 0, %s69
    %s70 = sphi 0, %s67
    %s71 = sphi 0, %s70
    %s87 = sphi 0, %s71
    %s93 = sphi 0, %s95
    %s96 = sphi 0, %s93
    %s97 = sphi 0, %s96
    %s113 = sphi 0, %s97
    %s119 = sphi 0, %s121
    %s122 = sphi 0, %s119
    %s123 = sphi 0, %s122
    %s139 = sphi 0, %s123
  $region4: #{tpu_custom_call.1} parent=0 // loop_header_branch
    %13 = sbr.rel (%p11) target = $region8
  $region5: #{tpu_custom_call.1} parent=0 // loop_body
    %s15 = ssub.s32 %s10, 1
    %s16 = ssub.s32 %s10, 2
    %s17 = sadd.s32 %s10, 1
    %s19 = sadd.s32 %s18, 1
    %p22 = scmp.eq.s32.totalorder %s10, 1
    %p23 = scmp.ne.s32.totalorder %s18, %s20
    %p24 = scmp.eq.s32.totalorder %s10, 0
    %p25 = por %p23, %p24
    %p26 = scmp.ne.s32.totalorder %s18, %s20
    %p27 = scmp.eq.s32.totalorder %s15, 1
    %p28 = por %p26, %p27
    %p29 = scmp.ne.s32.totalorder %s20, %s21
    %p30 = scmp.eq.s32.totalorder %s15, 0
    %p31 = por %p29, %p30
    %p32 = scmp.ne.s32.totalorder %s20, %s21
    %p33 = scmp.eq.s32.totalorder %s16, 1
    %p34 = por %p32, %p33
    %p36 = scmp.ne.s32.totalorder %s21, %s35
    %p37 = scmp.eq.s32.totalorder %s16, 0
    %p38 = por %p36, %p37
    %s39 = ssub.s32 %s10, %s17
    %p40 = scmp.eq.s32.totalorder %s39, 0
    %s42 = sadd.s32 %s41, 1
    %s43 = scalar_select %p40, %s41, %s42
    %p46 = pneg %p40
    %p47 = scmp.eq.s32.totalorder %s10, 1
    %p48 = por %p46, %p47
    %p49 = scmp.ne.s32.totalorder %s41, %s44
    %p50 = scmp.eq.s32.totalorder %s10, 0
    %p51 = por %p49, %p50
    %p52 = scmp.ne.s32.totalorder %s41, %s44
    %p53 = scmp.eq.s32.totalorder %s15, 1
    %p54 = por %p52, %p53
    %p55 = scmp.ne.s32.totalorder %s44, %s45
    %p56 = scmp.eq.s32.totalorder %s15, 0
    %p57 = por %p55, %p56
    %p58 = scmp.ne.s32.totalorder %s44, %s45
    %p59 = scmp.eq.s32.totalorder %s16, 1
    %p60 = por %p58, %p59
    %p62 = scmp.ne.s32.totalorder %s45, %s61
    %p63 = scmp.eq.s32.totalorder %s16, 0
    %p64 = por %p62, %p63
    %s65 = ssub.s32 %s10, %s17
    %p66 = scmp.eq.s32.totalorder %s65, 0
    %s68 = sadd.s32 %s67, 1
    %s69 = scalar_select %p66, %s67, %s68
    %p72 = pneg %p66
    %p73 = scmp.eq.s32.totalorder %s10, 1
    %p74 = por %p72, %p73
    %p75 = scmp.ne.s32.totalorder %s67, %s70
    %p76 = scmp.eq.s32.totalorder %s10, 0
    %p77 = por %p75, %p76
    %p78 = scmp.ne.s32.totalorder %s67, %s70
    %p79 = scmp.eq.s32.totalorder %s15, 1
    %p80 = por %p78, %p79
    %p81 = scmp.ne.s32.totalorder %s70, %s71
    %p82 = scmp.eq.s32.totalorder %s15, 0
    %p83 = por %p81, %p82
    %p84 = scmp.ne.s32.totalorder %s70, %s71
    %p85 = scmp.eq.s32.totalorder %s16, 1
    %p86 = por %p84, %p85
    %p88 = scmp.ne.s32.totalorder %s71, %s87
    %p89 = scmp.eq.s32.totalorder %s16, 0
    %p90 = por %p88, %p89
    %s91 = ssub.s32 %s10, %s17
    %p92 = scmp.eq.s32.totalorder %s91, 0
    %s94 = sadd.s32 %s93, 1
    %s95 = scalar_select %p92, %s93, %s94
    %p98 = pneg %p92
    %p99 = scmp.eq.s32.totalorder %s10, 1
    %p100 = por %p98, %p99
    %p101 = scmp.ne.s32.totalorder %s93, %s96
    %p102 = scmp.eq.s32.totalorder %s10, 0
    %p103 = por %p101, %p102
    %p104 = scmp.ne.s32.totalorder %s93, %s96
    %p105 = scmp.eq.s32.totalorder %s15, 1
    %p106 = por %p104, %p105
    %p107 = scmp.ne.s32.totalorder %s96, %s97
    %p108 = scmp.eq.s32.totalorder %s15, 0
    %p109 = por %p107, %p108
    %p110 = scmp.ne.s32.totalorder %s96, %s97
    %p111 = scmp.eq.s32.totalorder %s16, 1
    %p112 = por %p110, %p111
    %p114 = scmp.ne.s32.totalorder %s97, %s113
    %p115 = scmp.eq.s32.totalorder %s16, 0
    %p116 = por %p114, %p115
    %s117 = ssub.s32 %s10, %s17
    %p118 = scmp.eq.s32.totalorder %s117, 0
    %s120 = sadd.s32 %s119, 1
    %s121 = scalar_select %p118, %s119, %s120
    %p124 = pneg %p118
    %p125 = scmp.eq.s32.totalorder %s10, 1
    %p126 = por %p124, %p125
    %p127 = scmp.ne.s32.totalorder %s119, %s122
    %p128 = scmp.eq.s32.totalorder %s10, 0
    %p129 = por %p127, %p128
    %p130 = scmp.ne.s32.totalorder %s119, %s122
    %p131 = scmp.eq.s32.totalorder %s15, 1
    %p132 = por %p130, %p131
    %p133 = scmp.ne.s32.totalorder %s122, %s123
    %p134 = scmp.eq.s32.totalorder %s15, 0
    %p135 = por %p133, %p134
    %p136 = scmp.ne.s32.totalorder %s122, %s123
    %p137 = scmp.eq.s32.totalorder %s16, 1
    %p138 = por %p136, %p137
    %p140 = scmp.ne.s32.totalorder %s123, %s139
    %p141 = scmp.eq.s32.totalorder %s16, 0
    %p142 = por %p140, %p141
    %p143 = scmp.le.s32.totalorder 1, %s10
    %p144 = scmp.lt.s32.totalorder %s10, 3
    %p145 = pnand %p143, %p144
    %p146 = pneg %p145
    // Predicated region
    $region9: #{tpu_custom_call.1} parent=5 // pred_check
      _
    $region10: #{tpu_custom_call.1} parent=5 // pred_check_branch
      %148 = sbr.rel (%p145) target = $region12
    $region11: #{tpu_custom_call.1} parent=5 // pred_region
      %s149 = ssub.s32 %s10, 1
      // Predicated region
      $region13: #{tpu_custom_call.1} parent=11 // pred_check
        %p150 = pneg %p31
      $region14: #{tpu_custom_call.1} parent=11 // pred_check_branch
        %152 = sbr.rel (%p150) target = $region16
      $region15: #{tpu_custom_call.1} parent=11 // pred_region
        _
      $region16: #{tpu_custom_call.1} parent=11 // pred_fallthru
        _
    $region12: #{tpu_custom_call.1} parent=5 // pred_fallthru
      _
    %p153 = scmp.lt.s32.totalorder %s10, 2
    // Predicated region
    $region17: #{tpu_custom_call.1} parent=5 // pred_check
      %p154 = pneg %p153
    $region18: #{tpu_custom_call.1} parent=5 // pred_check_branch
      %156 = sbr.rel (%p154) target = $region20
    $region19: #{tpu_custom_call.1} parent=5 // pred_region
      // Predicated region
      $region21: #{tpu_custom_call.1} parent=19 // pred_check
        %p157 = pneg %p51
      $region22: #{tpu_custom_call.1} parent=19 // pred_check_branch
        %159 = sbr.rel (%p157) target = $region24
      $region23: #{tpu_custom_call.1} parent=19 // pred_region
        %s160 = smul.u32 16, %s10
        %p161 = scmp.lt.s32.totalorder %s160, 31
        %s162 = scalar_select %p161, %s160, 31
        %s163 = smul.addr %s162, 5
        %s164 = smul.addr %s163, 8
        %s165 = scalar_lea.vmem %s1, %s164
        %s166 = smul.u32 16, %s10
      $region24: #{tpu_custom_call.1} parent=19 // pred_fallthru
        _
      // Predicated region
      $region25: #{tpu_custom_call.1} parent=19 // pred_check
        %p167 = pneg %p77
      $region26: #{tpu_custom_call.1} parent=19 // pred_check_branch
        %169 = sbr.rel (%p167) target = $region28
      $region27: #{tpu_custom_call.1} parent=19 // pred_region
        %s170 = smul.u32 16, %s10
        %p171 = scmp.lt.s32.totalorder %s170, 31
        %s172 = scalar_select %p171, %s170, 31
        %s173 = smul.addr %s172, 8
        %s174 = scalar_lea.vmem %s2, %s173
        %s175 = smul.u32 16, %s10
      $region28: #{tpu_custom_call.1} parent=19 // pred_fallthru
        _
      // Predicated region
      $region29: #{tpu_custom_call.1} parent=19 // pred_check
        %p176 = pneg %p103
      $region30: #{tpu_custom_call.1} parent=19 // pred_check_branch
        %178 = sbr.rel (%p176) target = $region32
      $region31: #{tpu_custom_call.1} parent=19 // pred_region
        %s179 = smul.u32 16, %s10
        %p180 = scmp.lt.s32.totalorder %s179, 31
        %s181 = scalar_select %p180, %s179, 31
        %s182 = smul.addr %s181, 8
        %s183 = scalar_lea.vmem %s3, %s182
        %s184 = smul.u32 16, %s10
      $region32: #{tpu_custom_call.1} parent=19 // pred_fallthru
        _
    $region20: #{tpu_custom_call.1} parent=5 // pred_fallthru
      _
    %p185 = scmp.le.s32.totalorder 1, %s10
    %p186 = scmp.lt.s32.totalorder %s10, 3
    %p187 = pnand %p185, %p186
    %p188 = pneg %p187
    // Predicated region
    $region33: #{tpu_custom_call.1} parent=5 // pred_check
      _
    $region34: #{tpu_custom_call.1} parent=5 // pred_check_branch
      %190 = sbr.rel (%p187) target = $region36
    $region35: #{tpu_custom_call.1} parent=5 // pred_region
      %s191 = ssub.s32 %s10, 1
      %p192 = pneg %p31
      %p193 = pneg %p28
      %s194 = smul.u32 16, %s15
      %p195 = scmp.lt.s32.totalorder %s194, 31
      %s196 = scalar_select %p195, %s194, 31
      %s197 = smul.addr %s196, 5
      %s198 = smul.addr %s197, 8
      %s199 = scalar_lea.vmem %s1, %s198
      %p200 = pneg %p57
      %p201 = pneg %p54
      %s202 = smul.u32 16, %s15
      %p203 = scmp.lt.s32.totalorder %s202, 31
      %s204 = scalar_select %p203, %s202, 31
      %s205 = smul.addr %s204, 8
      %s206 = scalar_lea.vmem %s2, %s205
      %p207 = pneg %p83
      %p208 = pneg %p80
      %s209 = smul.u32 16, %s15
      %p210 = scmp.lt.s32.totalorder %s209, 31
      %s211 = scalar_select %p210, %s209, 31
      %s212 = smul.addr %s211, 8
      %s213 = scalar_lea.vmem %s3, %s212
      %p214 = pneg %p109
      %p215 = pneg %p106
      %p216 = pneg %p135
      %p217 = pneg %p132
      %s218 = smul.u32 16, %s15
      %p219 = scmp.lt.s32.totalorder %s218, 31
      %s220 = scalar_select %p219, %s218, 31
      %s221 = smul.addr %s220, 2
      %s222 = smul.addr %s221, 8
      %s223 = scalar_lea.vmem %s4, %s222
      %s224 = smul.u32 16, %s15
      %p225 = scmp.lt.s32.totalorder %s224, 31
      %s226 = scalar_select %p225, %s224, 31
      %s227 = smul.addr %s226, 5
      %s228 = smul.addr %s227, 8
      %s229 = scalar_lea.vmem %s1, %s228
      %s230 = smul.u32 16, %s15
      %s231 = smul.u32 16, %s15
      %p232 = scmp.lt.s32.totalorder %s231, 31
      %s233 = scalar_select %p232, %s231, 31
      %s234 = smul.addr %s233, 8
      %s235 = scalar_lea.vmem %s2, %s234
      %s236 = smul.u32 16, %s15
      %s237 = smul.u32 16, %s15
      %p238 = scmp.lt.s32.totalorder %s237, 31
      %s239 = scalar_select %p238, %s237, 31
      %s240 = smul.addr %s239, 8
      %s241 = scalar_lea.vmem %s3, %s240
      %s242 = smul.u32 16, %s15
      %s243 = smul.u32 16, %s15
      %p244 = scmp.lt.s32.totalorder %s243, 31
      %s245 = scalar_select %p244, %s243, 31
      %s246 = smul.addr %s245, 2
      %s247 = smul.addr %s246, 8
      %s248 = scalar_lea.vmem %s4, %s247
      %s249 = smul.u32 16, %s15
      %v250 = vld [vmem:[%s229] sm:$0xff]
      %v251 = vld [vmem:[%s229 + $0x8] sm:$0xff]
      %v252 = vld [vmem:[%s229 + $0x10] sm:$0xff]
      %v253 = vld [vmem:[%s229 + $0x18] sm:$0xff]
      %v254 = vld [vmem:[%s229 + $0x20] sm:$0xff]
      %v255 = vld [vmem:[%s229 + $0x28] sm:$0xff]
      %v256 = vld [vmem:[%s229 + $0x30] sm:$0xff]
      %v257 = vld [vmem:[%s229 + $0x38] sm:$0xff]
      %v258 = vld [vmem:[%s229 + $0x40] sm:$0xff]
      %v259 = vld [vmem:[%s229 + $0x48] sm:$0xff]
      %v260 = vld [vmem:[%s229 + $0x50] sm:$0xff]
      %v261 = vld [vmem:[%s229 + $0x58] sm:$0xff]
      %v262 = vld [vmem:[%s229 + $0x60] sm:$0xff]
      %v263 = vld [vmem:[%s229 + $0x68] sm:$0xff]
      %v264 = vld [vmem:[%s229 + $0x70] sm:$0xff]
      %v265 = vld [vmem:[%s229 + $0x78] sm:$0xff]
      %v266 = vld [vmem:[%s229 + $0x80] sm:$0xff]
      %v267 = vld [vmem:[%s229 + $0x88] sm:$0xff]
      %v268 = vld [vmem:[%s229 + $0x90] sm:$0xff]
      %v269 = vld [vmem:[%s229 + $0x98] sm:$0xff]
      %v270 = vld [vmem:[%s229 + $0xa0] sm:$0xff]
      %v271 = vld [vmem:[%s229 + $0xa8] sm:$0xff]
      %v272 = vld [vmem:[%s229 + $0xb0] sm:$0xff]
      %v273 = vld [vmem:[%s229 + $0xb8] sm:$0xff]
      %v274 = vld [vmem:[%s229 + $0xc0] sm:$0xff]
      %v275 = vld [vmem:[%s229 + $0xc8] sm:$0xff]
      %v276 = vld [vmem:[%s229 + $0xd0] sm:$0xff]
      %v277 = vld [vmem:[%s229 + $0xd8] sm:$0xff]
      %v278 = vld [vmem:[%s229 + $0xe0] sm:$0xff]
      %v279 = vld [vmem:[%s229 + $0xe8] sm:$0xff]
      %v280 = vld [vmem:[%s229 + $0xf0] sm:$0xff]
      %v281 = vld [vmem:[%s229 + $0xf8] sm:$0xff]
      %v282 = vld [vmem:[%s229 + $0x100] sm:$0xff]
      %v283 = vld [vmem:[%s229 + $0x108] sm:$0xff]
      %v284 = vld [vmem:[%s229 + $0x110] sm:$0xff]
      %v285 = vld [vmem:[%s229 + $0x118] sm:$0xff]
      %v286 = vld [vmem:[%s229 + $0x120] sm:$0xff]
      %v287 = vld [vmem:[%s229 + $0x128] sm:$0xff]
      %v288 = vld [vmem:[%s229 + $0x130] sm:$0xff]
      %v289 = vld [vmem:[%s229 + $0x138] sm:$0xff]
      %v290 = vld [vmem:[%s229 + $0x140] sm:$0xff]
      %v291 = vld [vmem:[%s229 + $0x148] sm:$0xff]
      %v292 = vld [vmem:[%s229 + $0x150] sm:$0xff]
      %v293 = vld [vmem:[%s229 + $0x158] sm:$0xff]
      %v294 = vld [vmem:[%s229 + $0x160] sm:$0xff]
      %v295 = vld [vmem:[%s229 + $0x168] sm:$0xff]
      %v296 = vld [vmem:[%s229 + $0x170] sm:$0xff]
      %v297 = vld [vmem:[%s229 + $0x178] sm:$0xff]
      %v298 = vld [vmem:[%s229 + $0x180] sm:$0xff]
      %v299 = vld [vmem:[%s229 + $0x188] sm:$0xff]
      %v300 = vld [vmem:[%s229 + $0x190] sm:$0xff]
      %v301 = vld [vmem:[%s229 + $0x198] sm:$0xff]
      %v302 = vld [vmem:[%s229 + $0x1a0] sm:$0xff]
      %v303 = vld [vmem:[%s229 + $0x1a8] sm:$0xff]
      %v304 = vld [vmem:[%s229 + $0x1b0] sm:$0xff]
      %v305 = vld [vmem:[%s229 + $0x1b8] sm:$0xff]
      %v306 = vld [vmem:[%s229 + $0x1c0] sm:$0xff]
      %v307 = vld [vmem:[%s229 + $0x1c8] sm:$0xff]
      %v308 = vld [vmem:[%s229 + $0x1d0] sm:$0xff]
      %v309 = vld [vmem:[%s229 + $0x1d8] sm:$0xff]
      %v310 = vld [vmem:[%s229 + $0x1e0] sm:$0xff]
      %v311 = vld [vmem:[%s229 + $0x1e8] sm:$0xff]
      %v312 = vld [vmem:[%s229 + $0x1f0] sm:$0xff]
      %v313 = vld [vmem:[%s229 + $0x1f8] sm:$0xff]
      %v314 = vld [vmem:[%s229 + $0x200] sm:$0xff]
      %v315 = vld [vmem:[%s229 + $0x208] sm:$0xff]
      %v316 = vld [vmem:[%s229 + $0x210] sm:$0xff]
      %v317 = vld [vmem:[%s229 + $0x218] sm:$0xff]
      %v318 = vld [vmem:[%s229 + $0x220] sm:$0xff]
      %v319 = vld [vmem:[%s229 + $0x228] sm:$0xff]
      %v320 = vld [vmem:[%s229 + $0x230] sm:$0xff]
      %v321 = vld [vmem:[%s229 + $0x238] sm:$0xff]
      %v322 = vld [vmem:[%s229 + $0x240] sm:$0xff]
      %v323 = vld [vmem:[%s229 + $0x248] sm:$0xff]
      %v324 = vld [vmem:[%s229 + $0x250] sm:$0xff]
      %v325 = vld [vmem:[%s229 + $0x258] sm:$0xff]
      %v326 = vld [vmem:[%s229 + $0x260] sm:$0xff]
      %v327 = vld [vmem:[%s229 + $0x268] sm:$0xff]
      %v328 = vld [vmem:[%s229 + $0x270] sm:$0xff]
      %v329 = vld [vmem:[%s229 + $0x278] sm:$0xff]
      %v330 = vld [vmem:[%s0] sm:$0xff]
      %v331 = vld [vmem:[%s0 + $0x8] sm:$0xff]
      %v332 = vld [vmem:[%s0 + $0x10] sm:$0xff]
      %v333 = vld [vmem:[%s0 + $0x18] sm:$0xff]
      %v334 = vld [vmem:[%s0 + $0x20] sm:$0xff]
      %v335 = vld [vmem:[%s0 + $0x28] sm:$0xff]
      %v336 = vld [vmem:[%s0 + $0x30] sm:$0xff]
      %v337 = vld [vmem:[%s0 + $0x38] sm:$0xff]
      %v338 = vld [vmem:[%s0 + $0x40] sm:$0xff]
      %v339 = vld [vmem:[%s0 + $0x48] sm:$0xff]
      %v340 = vld [vmem:[%s0 + $0x50] sm:$0xff]
      %v341 = vld [vmem:[%s0 + $0x58] sm:$0xff]
      %v342 = vld [vmem:[%s0 + $0x60] sm:$0xff]
      %v343 = vld [vmem:[%s0 + $0x68] sm:$0xff]
      %v344 = vld [vmem:[%s0 + $0x70] sm:$0xff]
      %v345 = vld [vmem:[%s0 + $0x78] sm:$0xff]
      %v346 = vld [vmem:[%s0 + $0x80] sm:$0xff]
      %v347 = vld [vmem:[%s0 + $0x88] sm:$0xff]
      %v348 = vld [vmem:[%s0 + $0x90] sm:$0xff]
      %v349 = vld [vmem:[%s0 + $0x98] sm:$0xff]
      %v350 = vld [vmem:[%s0 + $0xa0] sm:$0xff]
      %v351 = vld [vmem:[%s0 + $0xa8] sm:$0xff]
      %v352 = vld [vmem:[%s0 + $0xb0] sm:$0xff]
      %v353 = vld [vmem:[%s0 + $0xb8] sm:$0xff]
      %v354 = vld [vmem:[%s0 + $0xc0] sm:$0xff]
      %v355 = vld [vmem:[%s0 + $0xc8] sm:$0xff]
      %v356 = vld [vmem:[%s0 + $0xd0] sm:$0xff]
      %v357 = vld [vmem:[%s0 + $0xd8] sm:$0xff]
      %v358 = vld [vmem:[%s0 + $0xe0] sm:$0xff]
      %v359 = vld [vmem:[%s0 + $0xe8] sm:$0xff]
      %v360 = vld [vmem:[%s0 + $0xf0] sm:$0xff]
      %v361 = vld [vmem:[%s0 + $0xf8] sm:$0xff]
      %v362 = vld [vmem:[%s0 + $0x100] sm:$0xff]
      %v363 = vld [vmem:[%s0 + $0x108] sm:$0xff]
      %v364 = vld [vmem:[%s0 + $0x110] sm:$0xff]
      %v365 = vld [vmem:[%s0 + $0x118] sm:$0xff]
      %v366 = vld [vmem:[%s0 + $0x120] sm:$0xff]
      %v367 = vld [vmem:[%s0 + $0x128] sm:$0xff]
      %v368 = vld [vmem:[%s0 + $0x130] sm:$0xff]
      %v369 = vld [vmem:[%s0 + $0x138] sm:$0xff]
      %v370 = vld [vmem:[%s0 + $0x140] sm:$0xff]
      %v371 = vld [vmem:[%s0 + $0x148] sm:$0xff]
      %v372 = vld [vmem:[%s0 + $0x150] sm:$0xff]
      %v373 = vld [vmem:[%s0 + $0x158] sm:$0xff]
      %v374 = vld [vmem:[%s0 + $0x160] sm:$0xff]
      %v375 = vld [vmem:[%s0 + $0x168] sm:$0xff]
      %v376 = vld [vmem:[%s0 + $0x170] sm:$0xff]
      %v377 = vld [vmem:[%s0 + $0x178] sm:$0xff]
      %v378 = vld [vmem:[%s0 + $0x180] sm:$0xff]
      %v379 = vld [vmem:[%s0 + $0x188] sm:$0xff]
      %v380 = vld [vmem:[%s0 + $0x190] sm:$0xff]
      %v381 = vld [vmem:[%s0 + $0x198] sm:$0xff]
      %v382 = vld [vmem:[%s0 + $0x1a0] sm:$0xff]
      %v383 = vld [vmem:[%s0 + $0x1a8] sm:$0xff]
      %v384 = vld [vmem:[%s0 + $0x1b0] sm:$0xff]
      %v385 = vld [vmem:[%s0 + $0x1b8] sm:$0xff]
      %v386 = vld [vmem:[%s0 + $0x1c0] sm:$0xff]
      %v387 = vld [vmem:[%s0 + $0x1c8] sm:$0xff]
      %v388 = vld [vmem:[%s0 + $0x1d0] sm:$0xff]
      %v389 = vld [vmem:[%s0 + $0x1d8] sm:$0xff]
      %v390 = vld [vmem:[%s0 + $0x1e0] sm:$0xff]
      %v391 = vld [vmem:[%s0 + $0x1e8] sm:$0xff]
      %v392 = vld [vmem:[%s0 + $0x1f0] sm:$0xff]
      %v393 = vld [vmem:[%s0 + $0x1f8] sm:$0xff]
      %v394 = vld [vmem:[%s0 + $0x200] sm:$0xff]
      %v395 = vld [vmem:[%s0 + $0x208] sm:$0xff]
      %v396 = vld [vmem:[%s0 + $0x210] sm:$0xff]
      %v397 = vld [vmem:[%s0 + $0x218] sm:$0xff]
      %v398 = vld [vmem:[%s0 + $0x220] sm:$0xff]
      %v399 = vld [vmem:[%s0 + $0x228] sm:$0xff]
      %v400 = vld [vmem:[%s0 + $0x230] sm:$0xff]
      %v401 = vld [vmem:[%s0 + $0x238] sm:$0xff]
      %v402 = vld [vmem:[%s0 + $0x240] sm:$0xff]
      %v403 = vld [vmem:[%s0 + $0x248] sm:$0xff]
      %v404 = vld [vmem:[%s0 + $0x250] sm:$0xff]
      %v405 = vld [vmem:[%s0 + $0x258] sm:$0xff]
      %v406 = vld [vmem:[%s0 + $0x260] sm:$0xff]
      %v407 = vld [vmem:[%s0 + $0x268] sm:$0xff]
      %v408 = vld [vmem:[%s0 + $0x270] sm:$0xff]
      %v409 = vld [vmem:[%s0 + $0x278] sm:$0xff]
      %v410 = vld [vmem:[%s0 + $0x280] sm:$0xff]
      %v411 = vld [vmem:[%s0 + $0x288] sm:$0xff]
      %v412 = vld [vmem:[%s0 + $0x290] sm:$0xff]
      %v413 = vld [vmem:[%s0 + $0x298] sm:$0xff]
      %v414 = vld [vmem:[%s0 + $0x2a0] sm:$0xff]
      %v415 = vld [vmem:[%s0 + $0x2a8] sm:$0xff]
      %v416 = vld [vmem:[%s0 + $0x2b0] sm:$0xff]
      %v417 = vld [vmem:[%s0 + $0x2b8] sm:$0xff]
      %v418 = vld [vmem:[%s0 + $0x2c0] sm:$0xff]
      %v419 = vld [vmem:[%s0 + $0x2c8] sm:$0xff]
      %v420 = vld [vmem:[%s0 + $0x2d0] sm:$0xff]
      %v421 = vld [vmem:[%s0 + $0x2d8] sm:$0xff]
      %v422 = vld [vmem:[%s0 + $0x2e0] sm:$0xff]
      %v423 = vld [vmem:[%s0 + $0x2e8] sm:$0xff]
      %v424 = vld [vmem:[%s0 + $0x2f0] sm:$0xff]
      %v425 = vld [vmem:[%s0 + $0x2f8] sm:$0xff]
      %v426 = vld [vmem:[%s0 + $0x300] sm:$0xff]
      %v427 = vld [vmem:[%s0 + $0x308] sm:$0xff]
      %v428 = vld [vmem:[%s0 + $0x310] sm:$0xff]
      %v429 = vld [vmem:[%s0 + $0x318] sm:$0xff]
      %v430 = vld [vmem:[%s0 + $0x320] sm:$0xff]
      %v431 = vld [vmem:[%s0 + $0x328] sm:$0xff]
      %v432 = vld [vmem:[%s0 + $0x330] sm:$0xff]
      %v433 = vld [vmem:[%s0 + $0x338] sm:$0xff]
      %v434 = vld [vmem:[%s0 + $0x340] sm:$0xff]
      %v435 = vld [vmem:[%s0 + $0x348] sm:$0xff]
      %v436 = vld [vmem:[%s0 + $0x350] sm:$0xff]
      %v437 = vld [vmem:[%s0 + $0x358] sm:$0xff]
      %v438 = vld [vmem:[%s0 + $0x360] sm:$0xff]
      %v439 = vld [vmem:[%s0 + $0x368] sm:$0xff]
      %v440 = vld [vmem:[%s0 + $0x370] sm:$0xff]
      %v441 = vld [vmem:[%s0 + $0x378] sm:$0xff]
      %v442 = vld [vmem:[%s0 + $0x380] sm:$0xff]
      %v443 = vld [vmem:[%s0 + $0x388] sm:$0xff]
      %v444 = vld [vmem:[%s0 + $0x390] sm:$0xff]
      %v445 = vld [vmem:[%s0 + $0x398] sm:$0xff]
      %v446 = vld [vmem:[%s0 + $0x3a0] sm:$0xff]
      %v447 = vld [vmem:[%s0 + $0x3a8] sm:$0xff]
      %v448 = vld [vmem:[%s0 + $0x3b0] sm:$0xff]
      %v449 = vld [vmem:[%s0 + $0x3b8] sm:$0xff]
      %v450 = vld [vmem:[%s0 + $0x3c0] sm:$0xff]
      %v451 = vld [vmem:[%s0 + $0x3c8] sm:$0xff]
      %v452 = vld [vmem:[%s0 + $0x3d0] sm:$0xff]
      %v453 = vld [vmem:[%s0 + $0x3d8] sm:$0xff]
      %v454 = vld [vmem:[%s0 + $0x3e0] sm:$0xff]
      %v455 = vld [vmem:[%s0 + $0x3e8] sm:$0xff]
      %v456 = vld [vmem:[%s0 + $0x3f0] sm:$0xff]
      %v457 = vld [vmem:[%s0 + $0x3f8] sm:$0xff]
      %v458 = vld [vmem:[%s0 + $0x400] sm:$0xff]
      %v459 = vld [vmem:[%s0 + $0x408] sm:$0xff]
      %v460 = vld [vmem:[%s0 + $0x410] sm:$0xff]
      %v461 = vld [vmem:[%s0 + $0x418] sm:$0xff]
      %vm462 = vcmask 130048
      %v464 = vsel %vm462, %v254, 0
      %v467 = vsel %vm462, %v259, 0
      %v470 = vsel %vm462, %v264, 0
      %v473 = vsel %vm462, %v269, 0
      %v476 = vsel %vm462, %v274, 0
      %v479 = vsel %vm462, %v279, 0
      %v482 = vsel %vm462, %v284, 0
      %v485 = vsel %vm462, %v289, 0
      %v488 = vsel %vm462, %v294, 0
      %v491 = vsel %vm462, %v299, 0
      %v494 = vsel %vm462, %v304, 0
      %v497 = vsel %vm462, %v309, 0
      %v500 = vsel %vm462, %v314, 0
      %v503 = vsel %vm462, %v319, 0
      %v506 = vsel %vm462, %v324, 0
      %v509 = vsel %vm462, %v329, 0
      %511 = vmatprep.subr.mxu0 %v331
      %512 = vmatpush1.msra.mxu0 %v330
      %513 = vmatprep.subr.mxu0 %v333
      %514 = vmatpush1.msra.mxu0 %v332
      %515 = vmatprep.subr.mxu0 %v335
      %516 = vmatpush1.msra.mxu0 %v334
      %517 = vmatprep.subr.mxu0 %v337
      %518 = vmatpush1.msra.mxu0 %v336
      %519 = vmatprep.subr.mxu0 %v339
      %520 = vmatpush1.msra.mxu0 %v338
      %521 = vmatprep.subr.mxu0 %v341
      %522 = vmatpush1.msra.mxu0 %v340
      %523 = vmatprep.subr.mxu0 %v343
      %524 = vmatpush1.msra.mxu0 %v342
      %525 = vmatprep.subr.mxu0 %v345
      %526 = vmatpush1.msra.mxu0 %v344
      %527 = vmatprep.subr.mxu0 %v347
      %528 = vmatpush1.msra.mxu0 %v346
      %529 = vmatprep.subr.mxu0 %v349
      %530 = vmatpush1.msra.mxu0 %v348
      %531 = vmatprep.subr.mxu0 %v351
      %532 = vmatpush1.msra.mxu0 %v350
      %533 = vmatprep.subr.mxu0 %v353
      %534 = vmatpush1.msra.mxu0 %v352
      %535 = vmatprep.subr.mxu0 %v355
      %536 = vmatpush1.msra.mxu0 %v354
      %537 = vmatprep.subr.mxu0 %v357
      %538 = vmatpush1.msra.mxu0 %v356
      %539 = vmatprep.subr.mxu0 %v359
      %540 = vmatpush1.msra.mxu0 %v358
      %541 = vmatprep.subr.mxu0 %v361
      %542 = vmatpush1.msra.mxu0 %v360
      %543 = vmatprep.subr.mxu0 %v363
      %544 = vmatpush1.msra.mxu0 %v362
      %545 = vmatprep.subr.mxu0 %v365
      %546 = vmatpush1.msra.mxu0 %v364
      %547 = vmatprep.subr.mxu0 %v367
      %548 = vmatpush1.msra.mxu0 %v366
      %549 = vmatprep.subr.mxu0 %v369
      %550 = vmatpush1.msra.mxu0 %v368
      %551 = vmatprep.subr.mxu0 %v371
      %552 = vmatpush1.msra.mxu0 %v370
      %553 = vmatprep.subr.mxu0 %v373
      %554 = vmatpush1.msra.mxu0 %v372
      %555 = vmatprep.subr.mxu0 %v375
      %556 = vmatpush1.msra.mxu0 %v374
      %557 = vmatprep.subr.mxu0 %v377
      %558 = vmatpush1.msra.mxu0 %v376
      %559 = vmatprep.subr.mxu0 %v379
      %560 = vmatpush1.msra.mxu0 %v378
      %561 = vmatprep.subr.mxu0 %v381
      %562 = vmatpush1.msra.mxu0 %v380
      %563 = vmatprep.subr.mxu0 %v383
      %564 = vmatpush1.msra.mxu0 %v382
      %565 = vmatprep.subr.mxu0 %v385
      %566 = vmatpush1.msra.mxu0 %v384
      %567 = vmatprep.subr.mxu0 %v387
      %568 = vmatpush1.msra.mxu0 %v386
      %569 = vmatprep.subr.mxu0 %v389
      %570 = vmatpush1.msra.mxu0 %v388
      %571 = vmatprep.subr.mxu0 %v391
      %572 = vmatpush1.msra.mxu0 %v390
      %573 = vmatprep.subr.mxu0 %v393
      %574 = vmatpush1.msra.mxu0 %v392
      %575 = vmatprep.mubr.f32.mxu0 %v251
      %576 = vmatmul.mubr.f32.gmra.mrb[0].mxu0 %v250
      %v577 = vpop.f32.mrb[0].mxu0
      %v578 = vadd.f32 0.0, %v577
      %v579 = vpop.f32.mrb[0].mxu0
      %v580 = vadd.f32 0.0, %v579
      %581 = vmatprep.mubr.f32.mxu0 %v256
      %582 = vmatmul.mubr.f32.gmra.mrb[0].mxu0 %v255
      %v583 = vpop.f32.mrb[0].mxu0
      %v584 = vadd.f32 0.0, %v583
      %v585 = vpop.f32.mrb[0].mxu0
      %v586 = vadd.f32 0.0, %v585
      %587 = vmatprep.mubr.f32.mxu0 %v261
      %588 = vmatmul.mubr.f32.gmra.mrb[0].mxu0 %v260
      %v589 = vpop.f32.mrb[0].mxu0
      %v590 = vadd.f32 0.0, %v589
      %v591 = vpop.f32.mrb[0].mxu0
      %v592 = vadd.f32 0.0, %v591
      %593 = vmatprep.mubr.f32.mxu0 %v266
      %594 = vmatmul.mubr.f32.gmra.mrb[0].mxu0 %v265
      %v595 = vpop.f32.mrb[0].mxu0
      %v596 = vadd.f32 0.0, %v595
      %v597 = vpop.f32.mrb[0].mxu0
      %v598 = vadd.f32 0.0, %v597
      %599 = vmatprep.mubr.f32.mxu0 %v271
      %600 = vmatmul.mubr.f32.gmra.mrb[0].mxu0 %v270
      %v601 = vpop.f32.mrb[0].mxu0
      %v602 = vadd.f32 0.0, %v601
      %v603 = vpop.f32.mrb[0].mxu0
      %v604 = vadd.f32 0.0, %v603
      %605 = vmatprep.mubr.f32.mxu0 %v276
      %606 = vmatmul.mubr.f32.gmra.mrb[0].mxu0 %v275
      %v607 = vpop.f32.mrb[0].mxu0
      %v608 = vadd.f32 0.0, %v607
      %v609 = vpop.f32.mrb[0].mxu0
      %v610 = vadd.f32 0.0, %v609
      %611 = vmatprep.mubr.f32.mxu0 %v281
      %612 = vmatmul.mubr.f32.gmra.mrb[0].mxu0 %v280
      %v613 = vpop.f32.mrb[0].mxu0
      %v614 = vadd.f32 0.0, %v613
      %v615 = vpop.f32.mrb[0].mxu0
      %v616 = vadd.f32 0.0, %v615
      %617 = vmatprep.mubr.f32.mxu0 %v286
      %618 = vmatmul.mubr.f32.gmra.mrb[0].mxu0 %v285
      %v619 = vpop.f32.mrb[0].mxu0
      %v620 = vadd.f32 0.0, %v619
      %v621 = vpop.f32.mrb[0].mxu0
      %v622 = vadd.f32 0.0, %v621
      %623 = vmatprep.mubr.f32.mxu0 %v291
      %624 = vmatmul.mubr.f32.gmra.mrb[0].mxu0 %v290
      %v625 = vpop.f32.mrb[0].mxu0
      %v626 = vadd.f32 0.0, %v625
      %v627 = vpop.f32.mrb[0].mxu0
      %v628 = vadd.f32 0.0, %v627
      %629 = vmatprep.mubr.f32.mxu0 %v296
      %630 = vmatmul.mubr.f32.gmra.mrb[0].mxu0 %v295
      %v631 = vpop.f32.mrb[0].mxu0
      %v632 = vadd.f32 0.0, %v631
      %v633 = vpop.f32.mrb[0].mxu0
      %v634 = vadd.f32 0.0, %v633
      %635 = vmatprep.mubr.f32.mxu0 %v301
      %636 = vmatmul.mubr.f32.gmra.mrb[0].mxu0 %v300
      %v637 = vpop.f32.mrb[0].mxu0
      %v638 = vadd.f32 0.0, %v637
      %v639 = vpop.f32.mrb[0].mxu0
      %v640 = vadd.f32 0.0, %v639
      %641 = vmatprep.mubr.f32.mxu0 %v306
      %642 = vmatmul.mubr.f32.gmra.mrb[0].mxu0 %v305
      %v643 = vpop.f32.mrb[0].mxu0
      %v644 = vadd.f32 0.0, %v643
      %v645 = vpop.f32.mrb[0].mxu0
      %v646 = vadd.f32 0.0, %v645
      %647 = vmatprep.mubr.f32.mxu0 %v311
      %648 = vmatmul.mubr.f32.gmra.mrb[0].mxu0 %v310
      %v649 = vpop.f32.mrb[0].mxu0
      %v650 = vadd.f32 0.0, %v649
      %v651 = vpop.f32.mrb[0].mxu0
      %v652 = vadd.f32 0.0, %v651
      %653 = vmatprep.mubr.f32.mxu0 %v316
      %654 = vmatmul.mubr.f32.gmra.mrb[0].mxu0 %v315
      %v655 = vpop.f32.mrb[0].mxu0
      %v656 = vadd.f32 0.0, %v655
      %v657 = vpop.f32.mrb[0].mxu0
      %v658 = vadd.f32 0.0, %v657
      %659 = vmatprep.mubr.f32.mxu0 %v321
      %660 = vmatmul.mubr.f32.gmra.mrb[0].mxu0 %v320
      %v661 = vpop.f32.mrb[0].mxu0
      %v662 = vadd.f32 0.0, %v661
      %v663 = vpop.f32.mrb[0].mxu0
      %v664 = vadd.f32 0.0, %v663
      %665 = vmatprep.mubr.f32.mxu0 %v326
      %666 = vmatmul.mubr.f32.gmra.mrb[0].mxu0 %v325
      %v667 = vpop.f32.mrb[0].mxu0
      %v668 = vadd.f32 0.0, %v667
      %v669 = vpop.f32.mrb[0].mxu0
      %v670 = vadd.f32 0.0, %v669
      %671 = vdwg.mxu0
      %672 = vmatprep.subr.mxu0 %v395
      %673 = vmatpush1.msra.mxu0 %v394
      %674 = vmatprep.subr.mxu0 %v397
      %675 = vmatpush1.msra.mxu0 %v396
      %676 = vmatprep.subr.mxu0 %v399
      %677 = vmatpush1.msra.mxu0 %v398
      %678 = vmatprep.subr.mxu0 %v401
      %679 = vmatpush1.msra.mxu0 %v400
      %680 = vmatprep.subr.mxu0 %v403
      %681 = vmatpush1.msra.mxu0 %v402
      %682 = vmatprep.subr.mxu0 %v405
      %683 = vmatpush1.msra.mxu0 %v404
      %684 = vmatprep.subr.mxu0 %v407
      %685 = vmatpush1.msra.mxu0 %v406
      %686 = vmatprep.subr.mxu0 %v409
      %687 = vmatpush1.msra.mxu0 %v408
      %688 = vmatprep.subr.mxu0 %v411
      %689 = vmatpush1.msra.mxu0 %v410
      %690 = vmatprep.subr.mxu0 %v413
      %691 = vmatpush1.msra.mxu0 %v412
      %692 = vmatprep.subr.mxu0 %v415
      %693 = vmatpush1.msra.mxu0 %v414
      %694 = vmatprep.subr.mxu0 %v417
      %695 = vmatpush1.msra.mxu0 %v416
      %696 = vmatprep.subr.mxu0 %v419
      %697 = vmatpush1.msra.mxu0 %v418
      %698 = vmatprep.subr.mxu0 %v421
      %699 = vmatpush1.msra.mxu0 %v420
      %700 = vmatprep.subr.mxu0 %v423
      %701 = vmatpush1.msra.mxu0 %v422
      %702 = vmatprep.subr.mxu0 %v425
      %703 = vmatpush1.msra.mxu0 %v424
      %704 = vmatprep.subr.mxu0 %v427
      %705 = vmatpush1.msra.mxu0 %v426
      %706 = vmatprep.subr.mxu0 %v429
      %707 = vmatpush1.msra.mxu0 %v428
      %708 = vmatprep.subr.mxu0 %v431
      %709 = vmatpush1.msra.mxu0 %v430
      %710 = vmatprep.subr.mxu0 %v433
      %711 = vmatpush1.msra.mxu0 %v432
      %712 = vmatprep.subr.mxu0 %v435
      %713 = vmatpush1.msra.mxu0 %v434
      %714 = vmatprep.subr.mxu0 %v437
      %715 = vmatpush1.msra.mxu0 %v436
      %716 = vmatprep.subr.mxu0 %v439
      %717 = vmatpush1.msra.mxu0 %v438
      %718 = vmatprep.subr.mxu0 %v441
      %719 = vmatpush1.msra.mxu0 %v440
      %720 = vmatprep.subr.mxu0 %v443
      %721 = vmatpush1.msra.mxu0 %v442
      %722 = vmatprep.subr.mxu0 %v445
      %723 = vmatpush1.msra.mxu0 %v444
      %724 = vmatprep.subr.mxu0 %v447
      %725 = vmatpush1.msra.mxu0 %v446
      %726 = vmatprep.subr.mxu0 %v449
      %727 = vmatpush1.msra.mxu0 %v448
      %728 = vmatprep.subr.mxu0 %v451
      %729 = vmatpush1.msra.mxu0 %v450
      %730 = vmatprep.subr.mxu0 %v453
      %731 = vmatpush1.msra.mxu0 %v452
      %732 = vmatprep.subr.mxu0 %v455
      %733 = vmatpush1.msra.mxu0 %v454
      %734 = vmatprep.subr.mxu0 %v457
      %735 = vmatpush1.msra.mxu0 %v456
      %736 = vmatprep.mubr.f32.mxu0 %v253
      %737 = vmatmul.mubr.f32.gmra.mrb[0].mxu0 %v252
      %v738 = vpop.f32.mrb[0].mxu0
      %v739 = vadd.f32 %v578, %v738
      %v740 = vpop.f32.mrb[0].mxu0
      %v741 = vadd.f32 %v580, %v740
      %742 = vmatprep.mubr.f32.mxu0 %v258
      %743 = vmatmul.mubr.f32.gmra.mrb[0].mxu0 %v257
      %v744 = vpop.f32.mrb[0].mxu0
      %v745 = vadd.f32 %v584, %v744
      %v746 = vpop.f32.mrb[0].mxu0
      %v747 = vadd.f32 %v586, %v746
      %748 = vmatprep.mubr.f32.mxu0 %v263
      %749 = vmatmul.mubr.f32.gmra.mrb[0].mxu0 %v262
      %v750 = vpop.f32.mrb[0].mxu0
      %v751 = vadd.f32 %v590, %v750
      %v752 = vpop.f32.mrb[0].mxu0
      %v753 = vadd.f32 %v592, %v752
      %754 = vmatprep.mubr.f32.mxu0 %v268
      %755 = vmatmul.mubr.f32.gmra.mrb[0].mxu0 %v267
      %v756 = vpop.f32.mrb[0].mxu0
      %v757 = vadd.f32 %v596, %v756
      %v758 = vpop.f32.mrb[0].mxu0
      %v759 = vadd.f32 %v598, %v758
      %760 = vmatprep.mubr.f32.mxu0 %v273
      %761 = vmatmul.mubr.f32.gmra.mrb[0].mxu0 %v272
      %v762 = vpop.f32.mrb[0].mxu0
      %v763 = vadd.f32 %v602, %v762
      %v764 = vpop.f32.mrb[0].mxu0
      %v765 = vadd.f32 %v604, %v764
      %766 = vmatprep.mubr.f32.mxu0 %v278
      %767 = vmatmul.mubr.f32.gmra.mrb[0].mxu0 %v277
      %v768 = vpop.f32.mrb[0].mxu0
      %v769 = vadd.f32 %v608, %v768
      %v770 = vpop.f32.mrb[0].mxu0
      %v771 = vadd.f32 %v610, %v770
      %772 = vmatprep.mubr.f32.mxu0 %v283
      %773 = vmatmul.mubr.f32.gmra.mrb[0].mxu0 %v282
      %v774 = vpop.f32.mrb[0].mxu0
      %v775 = vadd.f32 %v614, %v774
      %v776 = vpop.f32.mrb[0].mxu0
      %v777 = vadd.f32 %v616, %v776
      %778 = vmatprep.mubr.f32.mxu0 %v288
      %779 = vmatmul.mubr.f32.gmra.mrb[0].mxu0 %v287
      %v780 = vpop.f32.mrb[0].mxu0
      %v781 = vadd.f32 %v620, %v780
      %v782 = vpop.f32.mrb[0].mxu0
      %v783 = vadd.f32 %v622, %v782
      %784 = vmatprep.mubr.f32.mxu0 %v293
      %785 = vmatmul.mubr.f32.gmra.mrb[0].mxu0 %v292
      %v786 = vpop.f32.mrb[0].mxu0
      %v787 = vadd.f32 %v626, %v786
      %v788 = vpop.f32.mrb[0].mxu0
      %v789 = vadd.f32 %v628, %v788
      %790 = vmatprep.mubr.f32.mxu0 %v298
      %791 = vmatmul.mubr.f32.gmra.mrb[0].mxu0 %v297
      %v792 = vpop.f32.mrb[0].mxu0
      %v793 = vadd.f32 %v632, %v792
      %v794 = vpop.f32.mrb[0].mxu0
      %v795 = vadd.f32 %v634, %v794
      %796 = vmatprep.mubr.f32.mxu0 %v303
      %797 = vmatmul.mubr.f32.gmra.mrb[0].mxu0 %v302
      %v798 = vpop.f32.mrb[0].mxu0
      %v799 = vadd.f32 %v638, %v798
      %v800 = vpop.f32.mrb[0].mxu0
      %v801 = vadd.f32 %v640, %v800
      %802 = vmatprep.mubr.f32.mxu0 %v308
      %803 = vmatmul.mubr.f32.gmra.mrb[0].mxu0 %v307
      %v804 = vpop.f32.mrb[0].mxu0
      %v805 = vadd.f32 %v644, %v804
      %v806 = vpop.f32.mrb[0].mxu0
      %v807 = vadd.f32 %v646, %v806
      %808 = vmatprep.mubr.f32.mxu0 %v313
      %809 = vmatmul.mubr.f32.gmra.mrb[0].mxu0 %v312
      %v810 = vpop.f32.mrb[0].mxu0
      %v811 = vadd.f32 %v650, %v810
      %v812 = vpop.f32.mrb[0].mxu0
      %v813 = vadd.f32 %v652, %v812
      %814 = vmatprep.mubr.f32.mxu0 %v318
      %815 = vmatmul.mubr.f32.gmra.mrb[0].mxu0 %v317
      %v816 = vpop.f32.mrb[0].mxu0
      %v817 = vadd.f32 %v656, %v816
      %v818 = vpop.f32.mrb[0].mxu0
      %v819 = vadd.f32 %v658, %v818
      %820 = vmatprep.mubr.f32.mxu0 %v323
      %821 = vmatmul.mubr.f32.gmra.mrb[0].mxu0 %v322
      %v822 = vpop.f32.mrb[0].mxu0
      %v823 = vadd.f32 %v662, %v822
      %v824 = vpop.f32.mrb[0].mxu0
      %v825 = vadd.f32 %v664, %v824
      %826 = vmatprep.mubr.f32.mxu0 %v328
      %827 = vmatmul.mubr.f32.gmra.mrb[0].mxu0 %v327
      %v828 = vpop.f32.mrb[0].mxu0
      %v829 = vadd.f32 %v668, %v828
      %v830 = vpop.f32.mrb[0].mxu0
      %v831 = vadd.f32 %v670, %v830
      %832 = vdwg.mxu0
      %833 = vmatprep.subr.mxu0 %v459
      %834 = vmatpush1.msra.mxu0 %v458
      %835 = vmatprep.subr.mxu0 %v461
      %836 = vmatpush1.msra.mxu0 %v460
      %837 = vmatprep.subr.mxu0 0.0
      %838 = vmatpush1.msra.mxu0 0.0
      %839 = vmatprep.subr.mxu0 0.0
      %840 = vmatpush1.msra.mxu0 0.0
      %841 = vmatprep.subr.mxu0 0.0
      %842 = vmatpush1.msra.mxu0 0.0
      %843 = vmatprep.subr.mxu0 0.0
      %844 = vmatpush1.msra.mxu0 0.0
      %845 = vmatprep.subr.mxu0 0.0
      %846 = vmatpush1.msra.mxu0 0.0
      %847 = vmatprep.subr.mxu0 0.0
      %848 = vmatpush1.msra.mxu0 0.0
      %849 = vmatprep.subr.mxu0 0.0
      %850 = vmatpush1.msra.mxu0 0.0
      %851 = vmatprep.subr.mxu0 0.0
      %852 = vmatpush1.msra.mxu0 0.0
      %853 = vmatprep.subr.mxu0 0.0
      %854 = vmatpush1.msra.mxu0 0.0
      %855 = vmatprep.subr.mxu0 0.0
      %856 = vmatpush1.msra.mxu0 0.0
      %857 = vmatprep.subr.mxu0 0.0
      %858 = vmatpush1.msra.mxu0 0.0
      %859 = vmatprep.subr.mxu0 0.0
      %860 = vmatpush1.msra.mxu0 0.0
      %861 = vmatprep.subr.mxu0 0.0
      %862 = vmatpush1.msra.mxu0 0.0
      %863 = vmatprep.subr.mxu0 0.0
      %864 = vmatpush1.msra.mxu0 0.0
      %865 = vmatprep.subr.mxu0 0.0
      %866 = vmatpush1.msra.mxu0 0.0
      %867 = vmatprep.subr.mxu0 0.0
      %868 = vmatpush1.msra.mxu0 0.0
      %869 = vmatprep.subr.mxu0 0.0
      %870 = vmatpush1.msra.mxu0 0.0
      %871 = vmatprep.subr.mxu0 0.0
      %872 = vmatpush1.msra.mxu0 0.0
      %873 = vmatprep.subr.mxu0 0.0
      %874 = vmatpush1.msra.mxu0 0.0
      %875 = vmatprep.subr.mxu0 0.0
      %876 = vmatpush1.msra.mxu0 0.0
      %877 = vmatprep.subr.mxu0 0.0
      %878 = vmatpush1.msra.mxu0 0.0
      %879 = vmatprep.subr.mxu0 0.0
      %880 = vmatpush1.msra.mxu0 0.0
      %881 = vmatprep.subr.mxu0 0.0
      %882 = vmatpush1.msra.mxu0 0.0
      %883 = vmatprep.subr.mxu0 0.0
      %884 = vmatpush1.msra.mxu0 0.0
      %885 = vmatprep.subr.mxu0 0.0
      %886 = vmatpush1.msra.mxu0 0.0
      %887 = vmatprep.subr.mxu0 0.0
      %888 = vmatpush1.msra.mxu0 0.0
      %889 = vmatprep.subr.mxu0 0.0
      %890 = vmatpush1.msra.mxu0 0.0
      %891 = vmatprep.subr.mxu0 0.0
      %892 = vmatpush1.msra.mxu0 0.0
      %893 = vmatprep.subr.mxu0 0.0
      %894 = vmatpush1.msra.mxu0 0.0
      %895 = vmatprep.subr.mxu0 0.0
      %896 = vmatpush1.msra.mxu0 0.0
      %897 = vmatprep.mubr.f32.mxu0 0.0
      %898 = vmatmul.mubr.f32.gmra.mrb[0].mxu0 %v464
      %v899 = vpop.f32.mrb[0].mxu0
      %v900 = vadd.f32 %v739, %v899
      %v901 = vpop.f32.mrb[0].mxu0
      %v902 = vadd.f32 %v741, %v901
      %903 = vmatprep.mubr.f32.mxu0 0.0
      %904 = vmatmul.mubr.f32.gmra.mrb[0].mxu0 %v467
      %v905 = vpop.f32.mrb[0].mxu0
      %v906 = vadd.f32 %v745, %v905
      %v907 = vpop.f32.mrb[0].mxu0
      %v908 = vadd.f32 %v747, %v907
      %909 = vmatprep.mubr.f32.mxu0 0.0
      %910 = vmatmul.mubr.f32.gmra.mrb[0].mxu0 %v470
      %v911 = vpop.f32.mrb[0].mxu0
      %v912 = vadd.f32 %v751, %v911
      %v913 = vpop.f32.mrb[0].mxu0
      %v914 = vadd.f32 %v753, %v913
      %915 = vmatprep.mubr.f32.mxu0 0.0
      %916 = vmatmul.mubr.f32.gmra.mrb[0].mxu0 %v473
      %v917 = vpop.f32.mrb[0].mxu0
      %v918 = vadd.f32 %v757, %v917
      %v919 = vpop.f32.mrb[0].mxu0
      %v920 = vadd.f32 %v759, %v919
      %921 = vmatprep.mubr.f32.mxu0 0.0
      %922 = vmatmul.mubr.f32.gmra.mrb[0].mxu0 %v476
      %v923 = vpop.f32.mrb[0].mxu0
      %v924 = vadd.f32 %v763, %v923
      %v925 = vpop.f32.mrb[0].mxu0
      %v926 = vadd.f32 %v765, %v925
      %927 = vmatprep.mubr.f32.mxu0 0.0
      %928 = vmatmul.mubr.f32.gmra.mrb[0].mxu0 %v479
      %v929 = vpop.f32.mrb[0].mxu0
      %v930 = vadd.f32 %v769, %v929
      %v931 = vpop.f32.mrb[0].mxu0
      %v932 = vadd.f32 %v771, %v931
      %933 = vmatprep.mubr.f32.mxu0 0.0
      %934 = vmatmul.mubr.f32.gmra.mrb[0].mxu0 %v482
      %v935 = vpop.f32.mrb[0].mxu0
      %v936 = vadd.f32 %v775, %v935
      %v937 = vpop.f32.mrb[0].mxu0
      %v938 = vadd.f32 %v777, %v937
      %939 = vmatprep.mubr.f32.mxu0 0.0
      %940 = vmatmul.mubr.f32.gmra.mrb[0].mxu0 %v485
      %v941 = vpop.f32.mrb[0].mxu0
      %v942 = vadd.f32 %v781, %v941
      %v943 = vpop.f32.mrb[0].mxu0
      %v944 = vadd.f32 %v783, %v943
      %945 = vmatprep.mubr.f32.mxu0 0.0
      %946 = vmatmul.mubr.f32.gmra.mrb[0].mxu0 %v488
      %v947 = vpop.f32.mrb[0].mxu0
      %v948 = vadd.f32 %v787, %v947
      %v949 = vpop.f32.mrb[0].mxu0
      %v950 = vadd.f32 %v789, %v949
      %951 = vmatprep.mubr.f32.mxu0 0.0
      %952 = vmatmul.mubr.f32.gmra.mrb[0].mxu0 %v491
      %v953 = vpop.f32.mrb[0].mxu0
      %v954 = vadd.f32 %v793, %v953
      %v955 = vpop.f32.mrb[0].mxu0
      %v956 = vadd.f32 %v795, %v955
      %957 = vmatprep.mubr.f32.mxu0 0.0
      %958 = vmatmul.mubr.f32.gmra.mrb[0].mxu0 %v494
      %v959 = vpop.f32.mrb[0].mxu0
      %v960 = vadd.f32 %v799, %v959
      %v961 = vpop.f32.mrb[0].mxu0
      %v962 = vadd.f32 %v801, %v961
      %963 = vmatprep.mubr.f32.mxu0 0.0
      %964 = vmatmul.mubr.f32.gmra.mrb[0].mxu0 %v497
      %v965 = vpop.f32.mrb[0].mxu0
      %v966 = vadd.f32 %v805, %v965
      %v967 = vpop.f32.mrb[0].mxu0
      %v968 = vadd.f32 %v807, %v967
      %969 = vmatprep.mubr.f32.mxu0 0.0
      %970 = vmatmul.mubr.f32.gmra.mrb[0].mxu0 %v500
      %v971 = vpop.f32.mrb[0].mxu0
      %v972 = vadd.f32 %v811, %v971
      %v973 = vpop.f32.mrb[0].mxu0
      %v974 = vadd.f32 %v813, %v973
      %975 = vmatprep.mubr.f32.mxu0 0.0
      %976 = vmatmul.mubr.f32.gmra.mrb[0].mxu0 %v503
      %v977 = vpop.f32.mrb[0].mxu0
      %v978 = vadd.f32 %v817, %v977
      %v979 = vpop.f32.mrb[0].mxu0
      %v980 = vadd.f32 %v819, %v979
      %981 = vmatprep.mubr.f32.mxu0 0.0
      %982 = vmatmul.mubr.f32.gmra.mrb[0].mxu0 %v506
      %v983 = vpop.f32.mrb[0].mxu0
      %v984 = vadd.f32 %v823, %v983
      %v985 = vpop.f32.mrb[0].mxu0
      %v986 = vadd.f32 %v825, %v985
      %987 = vmatprep.mubr.f32.mxu0 0.0
      %988 = vmatmul.mubr.f32.gmra.mrb[0].mxu0 %v509
      %v989 = vpop.f32.mrb[0].mxu0
      %v990 = vadd.f32 %v829, %v989
      %v991 = vpop.f32.mrb[0].mxu0
      %v992 = vadd.f32 %v831, %v991
      %993 = vdwg.mxu0
      %vm994 = vcmask 556032
      %v995 = vsel %vm994, %v902, 0.0
      %v996 = vadd.f32 %v900, %v995
      %997 = vadd.xlane.f32.xlu0 %v996
      %v998 = vpop.xlane.xlu0 %997
      %v999 = vsel %vm994, %v908, 0.0
      %v1000 = vadd.f32 %v906, %v999
      %1001 = vadd.xlane.f32.xlu0 %v1000
      %v1002 = vpop.xlane.xlu0 %1001
      %v1003 = vsel %vm994, %v914, 0.0
      %v1004 = vadd.f32 %v912, %v1003
      %1005 = vadd.xlane.f32.xlu0 %v1004
      %v1006 = vpop.xlane.xlu0 %1005
      %v1007 = vsel %vm994, %v920, 0.0
      %v1008 = vadd.f32 %v918, %v1007
      %1009 = vadd.xlane.f32.xlu0 %v1008
      %v1010 = vpop.xlane.xlu0 %1009
      %v1011 = vsel %vm994, %v926, 0.0
      %v1012 = vadd.f32 %v924, %v1011
      %1013 = vadd.xlane.f32.xlu0 %v1012
      %v1014 = vpop.xlane.xlu0 %1013
      %v1015 = vsel %vm994, %v932, 0.0
      %v1016 = vadd.f32 %v930, %v1015
      %1017 = vadd.xlane.f32.xlu0 %v1016
      %v1018 = vpop.xlane.xlu0 %1017
      %v1019 = vsel %vm994, %v938, 0.0
      %v1020 = vadd.f32 %v936, %v1019
      %1021 = vadd.xlane.f32.xlu0 %v1020
      %v1022 = vpop.xlane.xlu0 %1021
      %v1023 = vsel %vm994, %v944, 0.0
      %v1024 = vadd.f32 %v942, %v1023
      %1025 = vadd.xlane.f32.xlu0 %v1024
      %v1026 = vpop.xlane.xlu0 %1025
      %v1027 = vsel %vm994, %v950, 0.0
      %v1028 = vadd.f32 %v948, %v1027
      %1029 = vadd.xlane.f32.xlu0 %v1028
      %v1030 = vpop.xlane.xlu0 %1029
      %v1031 = vsel %vm994, %v956, 0.0
      %v1032 = vadd.f32 %v954, %v1031
      %1033 = vadd.xlane.f32.xlu0 %v1032
      %v1034 = vpop.xlane.xlu0 %1033
      %v1035 = vsel %vm994, %v962, 0.0
      %v1036 = vadd.f32 %v960, %v1035
      %1037 = vadd.xlane.f32.xlu0 %v1036
      %v1038 = vpop.xlane.xlu0 %1037
      %v1039 = vsel %vm994, %v968, 0.0
      %v1040 = vadd.f32 %v966, %v1039
      %1041 = vadd.xlane.f32.xlu0 %v1040
      %v1042 = vpop.xlane.xlu0 %1041
      %v1043 = vsel %vm994, %v974, 0.0
      %v1044 = vadd.f32 %v972, %v1043
      %1045 = vadd.xlane.f32.xlu0 %v1044
      %v1046 = vpop.xlane.xlu0 %1045
      %v1047 = vsel %vm994, %v980, 0.0
      %v1048 = vadd.f32 %v978, %v1047
      %1049 = vadd.xlane.f32.xlu0 %v1048
      %v1050 = vpop.xlane.xlu0 %1049
      %v1051 = vsel %vm994, %v986, 0.0
      %v1052 = vadd.f32 %v984, %v1051
      %1053 = vadd.xlane.f32.xlu0 %v1052
      %v1054 = vpop.xlane.xlu0 %1053
      %v1055 = vsel %vm994, %v992, 0.0
      %v1056 = vadd.f32 %v990, %v1055
      %1057 = vadd.xlane.f32.xlu0 %v1056
      %v1058 = vpop.xlane.xlu0 %1057
      %v1059 = vmul.f32 %v998, 0.0051020407
      %v1060 = vmul.f32 %v1002, 0.0051020407
      %v1061 = vmul.f32 %v1006, 0.0051020407
      %v1062 = vmul.f32 %v1010, 0.0051020407
      %v1063 = vmul.f32 %v1014, 0.0051020407
      %v1064 = vmul.f32 %v1018, 0.0051020407
      %v1065 = vmul.f32 %v1022, 0.0051020407
      %v1066 = vmul.f32 %v1026, 0.0051020407
      %v1067 = vmul.f32 %v1030, 0.0051020407
      %v1068 = vmul.f32 %v1034, 0.0051020407
      %v1069 = vmul.f32 %v1038, 0.0051020407
      %v1070 = vmul.f32 %v1042, 0.0051020407
      %v1071 = vmul.f32 %v1046, 0.0051020407
      %v1072 = vmul.f32 %v1050, 0.0051020407
      %v1073 = vmul.f32 %v1054, 0.0051020407
      %v1074 = vmul.f32 %v1058, 0.0051020407
      %v1075 = vmul.f32 %v900, %v900
      %v1076 = vmul.f32 %v902, %v902
      %v1077 = vmul.f32 %v906, %v906
      %v1078 = vmul.f32 %v908, %v908
      %v1079 = vmul.f32 %v912, %v912
      %v1080 = vmul.f32 %v914, %v914
      %v1081 = vmul.f32 %v918, %v918
      %v1082 = vmul.f32 %v920, %v920
      %v1083 = vmul.f32 %v924, %v924
      %v1084 = vmul.f32 %v926, %v926
      %v1085 = vmul.f32 %v930, %v930
      %v1086 = vmul.f32 %v932, %v932
      %v1087 = vmul.f32 %v936, %v936
      %v1088 = vmul.f32 %v938, %v938
      %v1089 = vmul.f32 %v942, %v942
      %v1090 = vmul.f32 %v944, %v944
      %v1091 = vmul.f32 %v948, %v948
      %v1092 = vmul.f32 %v950, %v950
      %v1093 = vmul.f32 %v954, %v954
      %v1094 = vmul.f32 %v956, %v956
      %v1095 = vmul.f32 %v960, %v960
      %v1096 = vmul.f32 %v962, %v962
      %v1097 = vmul.f32 %v966, %v966
      %v1098 = vmul.f32 %v968, %v968
      %v1099 = vmul.f32 %v972, %v972
      %v1100 = vmul.f32 %v974, %v974
      %v1101 = vmul.f32 %v978, %v978
      %v1102 = vmul.f32 %v980, %v980
      %v1103 = vmul.f32 %v984, %v984
      %v1104 = vmul.f32 %v986, %v986
      %v1105 = vmul.f32 %v990, %v990
      %v1106 = vmul.f32 %v992, %v992
      %v1107 = vsel %vm994, %v1076, 0.0
      %v1108 = vadd.f32 %v1075, %v1107
      %1109 = vadd.xlane.f32.xlu0 %v1108
      %v1110 = vpop.xlane.xlu0 %1109
      %v1111 = vsel %vm994, %v1078, 0.0
      %v1112 = vadd.f32 %v1077, %v1111
      %1113 = vadd.xlane.f32.xlu0 %v1112
      %v1114 = vpop.xlane.xlu0 %1113
      %v1115 = vsel %vm994, %v1080, 0.0
      %v1116 = vadd.f32 %v1079, %v1115
      %1117 = vadd.xlane.f32.xlu0 %v1116
      %v1118 = vpop.xlane.xlu0 %1117
      %v1119 = vsel %vm994, %v1082, 0.0
      %v1120 = vadd.f32 %v1081, %v1119
      %1121 = vadd.xlane.f32.xlu0 %v1120
      %v1122 = vpop.xlane.xlu0 %1121
      %v1123 = vsel %vm994, %v1084, 0.0
      %v1124 = vadd.f32 %v1083, %v1123
      %1125 = vadd.xlane.f32.xlu0 %v1124
      %v1126 = vpop.xlane.xlu0 %1125
      %v1127 = vsel %vm994, %v1086, 0.0
      %v1128 = vadd.f32 %v1085, %v1127
      %1129 = vadd.xlane.f32.xlu0 %v1128
      %v1130 = vpop.xlane.xlu0 %1129
      %v1131 = vsel %vm994, %v1088, 0.0
      %v1132 = vadd.f32 %v1087, %v1131
      %1133 = vadd.xlane.f32.xlu0 %v1132
      %v1134 = vpop.xlane.xlu0 %1133
      %v1135 = vsel %vm994, %v1090, 0.0
      %v1136 = vadd.f32 %v1089, %v1135
      %1137 = vadd.xlane.f32.xlu0 %v1136
      %v1138 = vpop.xlane.xlu0 %1137
      %v1139 = vsel %vm994, %v1092, 0.0
      %v1140 = vadd.f32 %v1091, %v1139
      %1141 = vadd.xlane.f32.xlu0 %v1140
      %v1142 = vpop.xlane.xlu0 %1141
      %v1143 = vsel %vm994, %v1094, 0.0
      %v1144 = vadd.f32 %v1093, %v1143
      %1145 = vadd.xlane.f32.xlu0 %v1144
      %v1146 = vpop.xlane.xlu0 %1145
      %v1147 = vsel %vm994, %v1096, 0.0
      %v1148 = vadd.f32 %v1095, %v1147
      %1149 = vadd.xlane.f32.xlu0 %v1148
      %v1150 = vpop.xlane.xlu0 %1149
      %v1151 = vsel %vm994, %v1098, 0.0
      %v1152 = vadd.f32 %v1097, %v1151
      %1153 = vadd.xlane.f32.xlu0 %v1152
      %v1154 = vpop.xlane.xlu0 %1153
      %v1155 = vsel %vm994, %v1100, 0.0
      %v1156 = vadd.f32 %v1099, %v1155
      %1157 = vadd.xlane.f32.xlu0 %v1156
      %v1158 = vpop.xlane.xlu0 %1157
      %v1159 = vsel %vm994, %v1102, 0.0
      %v1160 = vadd.f32 %v1101, %v1159
      %1161 = vadd.xlane.f32.xlu0 %v1160
      %v1162 = vpop.xlane.xlu0 %1161
      %v1163 = vsel %vm994, %v1104, 0.0
      %v1164 = vadd.f32 %v1103, %v1163
      %1165 = vadd.xlane.f32.xlu0 %v1164
      %v1166 = vpop.xlane.xlu0 %1165
      %v1167 = vsel %vm994, %v1106, 0.0
      %v1168 = vadd.f32 %v1105, %v1167
      %1169 = vadd.xlane.f32.xlu0 %v1168
      %v1170 = vpop.xlane.xlu0 %1169
      %v1171 = vmul.f32 %v1110, 0.0051020407
      %v1172 = vmul.f32 %v1114, 0.0051020407
      %v1173 = vmul.f32 %v1118, 0.0051020407
      %v1174 = vmul.f32 %v1122, 0.0051020407
      %v1175 = vmul.f32 %v1126, 0.0051020407
      %v1176 = vmul.f32 %v1130, 0.0051020407
      %v1177 = vmul.f32 %v1134, 0.0051020407
      %v1178 = vmul.f32 %v1138, 0.0051020407
      %v1179 = vmul.f32 %v1142, 0.0051020407
      %v1180 = vmul.f32 %v1146, 0.0051020407
      %v1181 = vmul.f32 %v1150, 0.0051020407
      %v1182 = vmul.f32 %v1154, 0.0051020407
      %v1183 = vmul.f32 %v1158, 0.0051020407
      %v1184 = vmul.f32 %v1162, 0.0051020407
      %v1185 = vmul.f32 %v1166, 0.0051020407
      %v1186 = vmul.f32 %v1170, 0.0051020407
      %v1187 = vmul.f32 %v1059, %v1059
      %v1188 = vmul.f32 %v1060, %v1060
      %v1189 = vmul.f32 %v1061, %v1061
      %v1190 = vmul.f32 %v1062, %v1062
      %v1191 = vmul.f32 %v1063, %v1063
      %v1192 = vmul.f32 %v1064, %v1064
      %v1193 = vmul.f32 %v1065, %v1065
      %v1194 = vmul.f32 %v1066, %v1066
      %v1195 = vmul.f32 %v1067, %v1067
      %v1196 = vmul.f32 %v1068, %v1068
      %v1197 = vmul.f32 %v1069, %v1069
      %v1198 = vmul.f32 %v1070, %v1070
      %v1199 = vmul.f32 %v1071, %v1071
      %v1200 = vmul.f32 %v1072, %v1072
      %v1201 = vmul.f32 %v1073, %v1073
      %v1202 = vmul.f32 %v1074, %v1074
      %v1203 = vsub.f32 %v1171, %v1187
      %v1204 = vsub.f32 %v1172, %v1188
      %v1205 = vsub.f32 %v1173, %v1189
      %v1206 = vsub.f32 %v1174, %v1190
      %v1207 = vsub.f32 %v1175, %v1191
      %v1208 = vsub.f32 %v1176, %v1192
      %v1209 = vsub.f32 %v1177, %v1193
      %v1210 = vsub.f32 %v1178, %v1194
      %v1211 = vsub.f32 %v1179, %v1195
      %v1212 = vsub.f32 %v1180, %v1196
      %v1213 = vsub.f32 %v1181, %v1197
      %v1214 = vsub.f32 %v1182, %v1198
      %v1215 = vsub.f32 %v1183, %v1199
      %v1216 = vsub.f32 %v1184, %v1200
      %v1217 = vsub.f32 %v1185, %v1201
      %v1218 = vsub.f32 %v1186, %v1202
      %v1219 = vld [vmem:[%s235] sm:$0xff]
      %v1220 = vld [vmem:[%s235 + $0x8] sm:$0xff]
      %v1221 = vld [vmem:[%s235 + $0x10] sm:$0xff]
      %v1222 = vld [vmem:[%s235 + $0x18] sm:$0xff]
      %v1223 = vld [vmem:[%s235 + $0x20] sm:$0xff]
      %v1224 = vld [vmem:[%s235 + $0x28] sm:$0xff]
      %v1225 = vld [vmem:[%s235 + $0x30] sm:$0xff]
      %v1226 = vld [vmem:[%s235 + $0x38] sm:$0xff]
      %v1227 = vld [vmem:[%s235 + $0x40] sm:$0xff]
      %v1228 = vld [vmem:[%s235 + $0x48] sm:$0xff]
      %v1229 = vld [vmem:[%s235 + $0x50] sm:$0xff]
      %v1230 = vld [vmem:[%s235 + $0x58] sm:$0xff]
      %v1231 = vld [vmem:[%s235 + $0x60] sm:$0xff]
      %v1232 = vld [vmem:[%s235 + $0x68] sm:$0xff]
      %v1233 = vld [vmem:[%s235 + $0x70] sm:$0xff]
      %v1234 = vld [vmem:[%s235 + $0x78] sm:$0xff]
      %v1235 = vadd.f32 %v1203, 0.001
      %v1236 = vadd.f32 %v1204, 0.001
      %v1237 = vadd.f32 %v1205, 0.001
      %v1238 = vadd.f32 %v1206, 0.001
      %v1239 = vadd.f32 %v1207, 0.001
      %v1240 = vadd.f32 %v1208, 0.001
      %v1241 = vadd.f32 %v1209, 0.001
      %v1242 = vadd.f32 %v1210, 0.001
      %v1243 = vadd.f32 %v1211, 0.001
      %v1244 = vadd.f32 %v1212, 0.001
      %v1245 = vadd.f32 %v1213, 0.001
      %v1246 = vadd.f32 %v1214, 0.001
      %v1247 = vadd.f32 %v1215, 0.001
      %v1248 = vadd.f32 %v1216, 0.001
      %v1249 = vadd.f32 %v1217, 0.001
      %v1250 = vadd.f32 %v1218, 0.001
      %v1251 = vrsqrt.pop %v1235
      %v1252 = vrsqrt.pop %v1236
      %v1253 = vrsqrt.pop %v1237
      %v1254 = vrsqrt.pop %v1238
      %v1255 = vrsqrt.pop %v1239
      %v1256 = vrsqrt.pop %v1240
      %v1257 = vrsqrt.pop %v1241
      %v1258 = vrsqrt.pop %v1242
      %v1259 = vrsqrt.pop %v1243
      %v1260 = vrsqrt.pop %v1244
      %v1261 = vrsqrt.pop %v1245
      %v1262 = vrsqrt.pop %v1246
      %v1263 = vrsqrt.pop %v1247
      %v1264 = vrsqrt.pop %v1248
      %v1265 = vrsqrt.pop %v1249
      %v1266 = vrsqrt.pop %v1250
      %v1267 = vmul.f32 %v1219, %v1251
      %v1268 = vmul.f32 %v1220, %v1252
      %v1269 = vmul.f32 %v1221, %v1253
      %v1270 = vmul.f32 %v1222, %v1254
      %v1271 = vmul.f32 %v1223, %v1255
      %v1272 = vmul.f32 %v1224, %v1256
      %v1273 = vmul.f32 %v1225, %v1257
      %v1274 = vmul.f32 %v1226, %v1258
      %v1275 = vmul.f32 %v1227, %v1259
      %v1276 = vmul.f32 %v1228, %v1260
      %v1277 = vmul.f32 %v1229, %v1261
      %v1278 = vmul.f32 %v1230, %v1262
      %v1279 = vmul.f32 %v1231, %v1263
      %v1280 = vmul.f32 %v1232, %v1264
      %v1281 = vmul.f32 %v1233, %v1265
      %v1282 = vmul.f32 %v1234, %v1266
      %v1283 = vld [vmem:[%s241] sm:$0xff]
      %v1284 = vld [vmem:[%s241 + $0x8] sm:$0xff]
      %v1285 = vld [vmem:[%s241 + $0x10] sm:$0xff]
      %v1286 = vld [vmem:[%s241 + $0x18] sm:$0xff]
      %v1287 = vld [vmem:[%s241 + $0x20] sm:$0xff]
      %v1288 = vld [vmem:[%s241 + $0x28] sm:$0xff]
      %v1289 = vld [vmem:[%s241 + $0x30] sm:$0xff]
      %v1290 = vld [vmem:[%s241 + $0x38] sm:$0xff]
      %v1291 = vld [vmem:[%s241 + $0x40] sm:$0xff]
      %v1292 = vld [vmem:[%s241 + $0x48] sm:$0xff]
      %v1293 = vld [vmem:[%s241 + $0x50] sm:$0xff]
      %v1294 = vld [vmem:[%s241 + $0x58] sm:$0xff]
      %v1295 = vld [vmem:[%s241 + $0x60] sm:$0xff]
      %v1296 = vld [vmem:[%s241 + $0x68] sm:$0xff]
      %v1297 = vld [vmem:[%s241 + $0x70] sm:$0xff]
      %v1298 = vld [vmem:[%s241 + $0x78] sm:$0xff]
      %v1299 = vmul.f32 %v1059, %v1267
      %v1300 = vmul.f32 %v1060, %v1268
      %v1301 = vmul.f32 %v1061, %v1269
      %v1302 = vmul.f32 %v1062, %v1270
      %v1303 = vmul.f32 %v1063, %v1271
      %v1304 = vmul.f32 %v1064, %v1272
      %v1305 = vmul.f32 %v1065, %v1273
      %v1306 = vmul.f32 %v1066, %v1274
      %v1307 = vmul.f32 %v1067, %v1275
      %v1308 = vmul.f32 %v1068, %v1276
      %v1309 = vmul.f32 %v1069, %v1277
      %v1310 = vmul.f32 %v1070, %v1278
      %v1311 = vmul.f32 %v1071, %v1279
      %v1312 = vmul.f32 %v1072, %v1280
      %v1313 = vmul.f32 %v1073, %v1281
      %v1314 = vmul.f32 %v1074, %v1282
      %v1315 = vsub.f32 %v1283, %v1299
      %v1316 = vsub.f32 %v1284, %v1300
      %v1317 = vsub.f32 %v1285, %v1301
      %v1318 = vsub.f32 %v1286, %v1302
      %v1319 = vsub.f32 %v1287, %v1303
      %v1320 = vsub.f32 %v1288, %v1304
      %v1321 = vsub.f32 %v1289, %v1305
      %v1322 = vsub.f32 %v1290, %v1306
      %v1323 = vsub.f32 %v1291, %v1307
      %v1324 = vsub.f32 %v1292, %v1308
      %v1325 = vsub.f32 %v1293, %v1309
      %v1326 = vsub.f32 %v1294, %v1310
      %v1327 = vsub.f32 %v1295, %v1311
      %v1328 = vsub.f32 %v1296, %v1312
      %v1329 = vsub.f32 %v1297, %v1313
      %v1330 = vsub.f32 %v1298, %v1314
      %1332 = vset.pattern.permute.xlu0 0
      %1333 = vperm.xlu0 %1332, %v1267
      %v1334 = vpop.permute.xlu0 %1333
      %1337 = vset.pattern.permute.xlu0 0
      %1338 = vperm.xlu0 %1337, %v1268
      %v1339 = vpop.permute.xlu0 %1338
      %1342 = vset.pattern.permute.xlu0 0
      %1343 = vperm.xlu0 %1342, %v1269
      %v1344 = vpop.permute.xlu0 %1343
      %1347 = vset.pattern.permute.xlu0 0
      %1348 = vperm.xlu0 %1347, %v1270
      %v1349 = vpop.permute.xlu0 %1348
      %1352 = vset.pattern.permute.xlu0 0
      %1353 = vperm.xlu0 %1352, %v1271
      %v1354 = vpop.permute.xlu0 %1353
      %1357 = vset.pattern.permute.xlu0 0
      %1358 = vperm.xlu0 %1357, %v1272
      %v1359 = vpop.permute.xlu0 %1358
      %1362 = vset.pattern.permute.xlu0 0
      %1363 = vperm.xlu0 %1362, %v1273
      %v1364 = vpop.permute.xlu0 %1363
      %1367 = vset.pattern.permute.xlu0 0
      %1368 = vperm.xlu0 %1367, %v1274
      %v1369 = vpop.permute.xlu0 %1368
      %1372 = vset.pattern.permute.xlu0 0
      %1373 = vperm.xlu0 %1372, %v1275
      %v1374 = vpop.permute.xlu0 %1373
      %1377 = vset.pattern.permute.xlu0 0
      %1378 = vperm.xlu0 %1377, %v1276
      %v1379 = vpop.permute.xlu0 %1378
      %1382 = vset.pattern.permute.xlu0 0
      %1383 = vperm.xlu0 %1382, %v1277
      %v1384 = vpop.permute.xlu0 %1383
      %1387 = vset.pattern.permute.xlu0 0
      %1388 = vperm.xlu0 %1387, %v1278
      %v1389 = vpop.permute.xlu0 %1388
      %1392 = vset.pattern.permute.xlu0 0
      %1393 = vperm.xlu0 %1392, %v1279
      %v1394 = vpop.permute.xlu0 %1393
      %1397 = vset.pattern.permute.xlu0 0
      %1398 = vperm.xlu0 %1397, %v1280
      %v1399 = vpop.permute.xlu0 %1398
      %1402 = vset.pattern.permute.xlu0 0
      %1403 = vperm.xlu0 %1402, %v1281
      %v1404 = vpop.permute.xlu0 %1403
      %1407 = vset.pattern.permute.xlu0 0
      %1408 = vperm.xlu0 %1407, %v1282
      %v1409 = vpop.permute.xlu0 %1408
      %v1411 = vmul.f32 %v900, %v1334
      %v1412 = vmul.f32 %v902, %v1334
      %v1413 = vmul.f32 %v906, %v1339
      %v1414 = vmul.f32 %v908, %v1339
      %v1415 = vmul.f32 %v912, %v1344
      %v1416 = vmul.f32 %v914, %v1344
      %v1417 = vmul.f32 %v918, %v1349
      %v1418 = vmul.f32 %v920, %v1349
      %v1419 = vmul.f32 %v924, %v1354
      %v1420 = vmul.f32 %v926, %v1354
      %v1421 = vmul.f32 %v930, %v1359
      %v1422 = vmul.f32 %v932, %v1359
      %v1423 = vmul.f32 %v936, %v1364
      %v1424 = vmul.f32 %v938, %v1364
      %v1425 = vmul.f32 %v942, %v1369
      %v1426 = vmul.f32 %v944, %v1369
      %v1427 = vmul.f32 %v948, %v1374
      %v1428 = vmul.f32 %v950, %v1374
      %v1429 = vmul.f32 %v954, %v1379
      %v1430 = vmul.f32 %v956, %v1379
      %v1431 = vmul.f32 %v960, %v1384
      %v1432 = vmul.f32 %v962, %v1384
      %v1433 = vmul.f32 %v966, %v1389
      %v1434 = vmul.f32 %v968, %v1389
      %v1435 = vmul.f32 %v972, %v1394
      %v1436 = vmul.f32 %v974, %v1394
      %v1437 = vmul.f32 %v978, %v1399
      %v1438 = vmul.f32 %v980, %v1399
      %v1439 = vmul.f32 %v984, %v1404
      %v1440 = vmul.f32 %v986, %v1404
      %v1441 = vmul.f32 %v990, %v1409
      %v1442 = vmul.f32 %v992, %v1409
      %1444 = vset.pattern.permute.xlu0 0
      %1445 = vperm.xlu0 %1444, %v1315
      %v1446 = vpop.permute.xlu0 %1445
      %1449 = vset.pattern.permute.xlu0 0
      %1450 = vperm.xlu0 %1449, %v1316
      %v1451 = vpop.permute.xlu0 %1450
      %1454 = vset.pattern.permute.xlu0 0
      %1455 = vperm.xlu0 %1454, %v1317
      %v1456 = vpop.permute.xlu0 %1455
      %1459 = vset.pattern.permute.xlu0 0
      %1460 = vperm.xlu0 %1459, %v1318
      %v1461 = vpop.permute.xlu0 %1460
      %1464 = vset.pattern.permute.xlu0 0
      %1465 = vperm.xlu0 %1464, %v1319
      %v1466 = vpop.permute.xlu0 %1465
      %1469 = vset.pattern.permute.xlu0 0
      %1470 = vperm.xlu0 %1469, %v1320
      %v1471 = vpop.permute.xlu0 %1470
      %1474 = vset.pattern.permute.xlu0 0
      %1475 = vperm.xlu0 %1474, %v1321
      %v1476 = vpop.permute.xlu0 %1475
      %1479 = vset.pattern.permute.xlu0 0
      %1480 = vperm.xlu0 %1479, %v1322
      %v1481 = vpop.permute.xlu0 %1480
      %1484 = vset.pattern.permute.xlu0 0
      %1485 = vperm.xlu0 %1484, %v1323
      %v1486 = vpop.permute.xlu0 %1485
      %1489 = vset.pattern.permute.xlu0 0
      %1490 = vperm.xlu0 %1489, %v1324
      %v1491 = vpop.permute.xlu0 %1490
      %1494 = vset.pattern.permute.xlu0 0
      %1495 = vperm.xlu0 %1494, %v1325
      %v1496 = vpop.permute.xlu0 %1495
      %1499 = vset.pattern.permute.xlu0 0
      %1500 = vperm.xlu0 %1499, %v1326
      %v1501 = vpop.permute.xlu0 %1500
      %1504 = vset.pattern.permute.xlu0 0
      %1505 = vperm.xlu0 %1504, %v1327
      %v1506 = vpop.permute.xlu0 %1505
      %1509 = vset.pattern.permute.xlu0 0
      %1510 = vperm.xlu0 %1509, %v1328
      %v1511 = vpop.permute.xlu0 %1510
      %1514 = vset.pattern.permute.xlu0 0
      %1515 = vperm.xlu0 %1514, %v1329
      %v1516 = vpop.permute.xlu0 %1515
      %1519 = vset.pattern.permute.xlu0 0
      %1520 = vperm.xlu0 %1519, %v1330
      %v1521 = vpop.permute.xlu0 %1520
      %v1523 = vadd.f32 %v1411, %v1446
      %v1524 = vadd.f32 %v1412, %v1446
      %v1525 = vadd.f32 %v1413, %v1451
      %v1526 = vadd.f32 %v1414, %v1451
      %v1527 = vadd.f32 %v1415, %v1456
      %v1528 = vadd.f32 %v1416, %v1456
      %v1529 = vadd.f32 %v1417, %v1461
      %v1530 = vadd.f32 %v1418, %v1461
      %v1531 = vadd.f32 %v1419, %v1466
      %v1532 = vadd.f32 %v1420, %v1466
      %v1533 = vadd.f32 %v1421, %v1471
      %v1534 = vadd.f32 %v1422, %v1471
      %v1535 = vadd.f32 %v1423, %v1476
      %v1536 = vadd.f32 %v1424, %v1476
      %v1537 = vadd.f32 %v1425, %v1481
      %v1538 = vadd.f32 %v1426, %v1481
      %v1539 = vadd.f32 %v1427, %v1486
      %v1540 = vadd.f32 %v1428, %v1486
      %v1541 = vadd.f32 %v1429, %v1491
      %v1542 = vadd.f32 %v1430, %v1491
      %v1543 = vadd.f32 %v1431, %v1496
      %v1544 = vadd.f32 %v1432, %v1496
      %v1545 = vadd.f32 %v1433, %v1501
      %v1546 = vadd.f32 %v1434, %v1501
      %v1547 = vadd.f32 %v1435, %v1506
      %v1548 = vadd.f32 %v1436, %v1506
      %v1549 = vadd.f32 %v1437, %v1511
      %v1550 = vadd.f32 %v1438, %v1511
      %v1551 = vadd.f32 %v1439, %v1516
      %v1552 = vadd.f32 %v1440, %v1516
      %v1553 = vadd.f32 %v1441, %v1521
      %v1554 = vadd.f32 %v1442, %v1521
      %v1555 = vmax.f32 %v1523, 0.0
      %v1556 = vmax.f32 %v1524, 0.0
      %v1557 = vmax.f32 %v1525, 0.0
      %v1558 = vmax.f32 %v1526, 0.0
      %v1559 = vmax.f32 %v1527, 0.0
      %v1560 = vmax.f32 %v1528, 0.0
      %v1561 = vmax.f32 %v1529, 0.0
      %v1562 = vmax.f32 %v1530, 0.0
      %v1563 = vmax.f32 %v1531, 0.0
      %v1564 = vmax.f32 %v1532, 0.0
      %v1565 = vmax.f32 %v1533, 0.0
      %v1566 = vmax.f32 %v1534, 0.0
      %v1567 = vmax.f32 %v1535, 0.0
      %v1568 = vmax.f32 %v1536, 0.0
      %v1569 = vmax.f32 %v1537, 0.0
      %v1570 = vmax.f32 %v1538, 0.0
      %v1571 = vmax.f32 %v1539, 0.0
      %v1572 = vmax.f32 %v1540, 0.0
      %v1573 = vmax.f32 %v1541, 0.0
      %v1574 = vmax.f32 %v1542, 0.0
      %v1575 = vmax.f32 %v1543, 0.0
      %v1576 = vmax.f32 %v1544, 0.0
      %v1577 = vmax.f32 %v1545, 0.0
      %v1578 = vmax.f32 %v1546, 0.0
      %v1579 = vmax.f32 %v1547, 0.0
      %v1580 = vmax.f32 %v1548, 0.0
      %v1581 = vmax.f32 %v1549, 0.0
      %v1582 = vmax.f32 %v1550, 0.0
      %v1583 = vmax.f32 %v1551, 0.0
      %v1584 = vmax.f32 %v1552, 0.0
      %v1585 = vmax.f32 %v1553, 0.0
      %v1586 = vmax.f32 %v1554, 0.0
      %1587 = vst [vmem:[%s248] sm:$0xff] %v1555
      %1588 = vst.msk [vmem:[%s248 + $0x8] sm:$0xff] %vm994, %v1556
      %1589 = vst [vmem:[%s248 + $0x10] sm:$0xff] %v1557
      %1590 = vst.msk [vmem:[%s248 + $0x18] sm:$0xff] %vm994, %v1558
      %1591 = vst [vmem:[%s248 + $0x20] sm:$0xff] %v1559
      %1592 = vst.msk [vmem:[%s248 + $0x28] sm:$0xff] %vm994, %v1560
      %1593 = vst [vmem:[%s248 + $0x30] sm:$0xff] %v1561
      %1594 = vst.msk [vmem:[%s248 + $0x38] sm:$0xff] %vm994, %v1562
      %1595 = vst [vmem:[%s248 + $0x40] sm:$0xff] %v1563
      %1596 = vst.msk [vmem:[%s248 + $0x48] sm:$0xff] %vm994, %v1564
      %1597 = vst [vmem:[%s248 + $0x50] sm:$0xff] %v1565
      %1598 = vst.msk [vmem:[%s248 + $0x58] sm:$0xff] %vm994, %v1566
      %1599 = vst [vmem:[%s248 + $0x60] sm:$0xff] %v1567
      %1600 = vst.msk [vmem:[%s248 + $0x68] sm:$0xff] %vm994, %v1568
      %1601 = vst [vmem:[%s248 + $0x70] sm:$0xff] %v1569
      %1602 = vst.msk [vmem:[%s248 + $0x78] sm:$0xff] %vm994, %v1570
      %1603 = vst [vmem:[%s248 + $0x80] sm:$0xff] %v1571
      %1604 = vst.msk [vmem:[%s248 + $0x88] sm:$0xff] %vm994, %v1572
      %1605 = vst [vmem:[%s248 + $0x90] sm:$0xff] %v1573
      %1606 = vst.msk [vmem:[%s248 + $0x98] sm:$0xff] %vm994, %v1574
      %1607 = vst [vmem:[%s248 + $0xa0] sm:$0xff] %v1575
      %1608 = vst.msk [vmem:[%s248 + $0xa8] sm:$0xff] %vm994, %v1576
      %1609 = vst [vmem:[%s248 + $0xb0] sm:$0xff] %v1577
      %1610 = vst.msk [vmem:[%s248 + $0xb8] sm:$0xff] %vm994, %v1578
      %1611 = vst [vmem:[%s248 + $0xc0] sm:$0xff] %v1579
      %1612 = vst.msk [vmem:[%s248 + $0xc8] sm:$0xff] %vm994, %v1580
      %1613 = vst [vmem:[%s248 + $0xd0] sm:$0xff] %v1581
      %1614 = vst.msk [vmem:[%s248 + $0xd8] sm:$0xff] %vm994, %v1582
      %1615 = vst [vmem:[%s248 + $0xe0] sm:$0xff] %v1583
      %1616 = vst.msk [vmem:[%s248 + $0xe8] sm:$0xff] %vm994, %v1584
      %1617 = vst [vmem:[%s248 + $0xf0] sm:$0xff] %v1585
      %1618 = vst.msk [vmem:[%s248 + $0xf8] sm:$0xff] %vm994, %v1586
      %s1619 = smul.u32 16, %s15
      %p1620 = scmp.lt.s32.totalorder %s1619, 31
      %s1621 = scalar_select %p1620, %s1619, 31
      %s1622 = smul.addr %s1621, 2
      %s1623 = smul.addr %s1622, 8
      %s1624 = scalar_lea.vmem %s4, %s1623
      // Predicated region
      $region37: #{tpu_custom_call.1} parent=35 // pred_check
        %p1625 = pneg %p132
      $region38: #{tpu_custom_call.1} parent=35 // pred_check_branch
        %1627 = sbr.rel (%p1625) target = $region40
      $region39: #{tpu_custom_call.1} parent=35 // pred_region
        %s1628 = smul.u32 16, %s15
      $region40: #{tpu_custom_call.1} parent=35 // pred_fallthru
        _
    $region36: #{tpu_custom_call.1} parent=5 // pred_fallthru
      _
    %p1629 = scmp.le.s32.totalorder 2, %s10
    // Predicated region
    $region41: #{tpu_custom_call.1} parent=5 // pred_check
      %p1630 = pneg %p1629
    $region42: #{tpu_custom_call.1} parent=5 // pred_check_branch
      %1632 = sbr.rel (%p1630) target = $region44
    $region43: #{tpu_custom_call.1} parent=5 // pred_region
      %s1633 = ssub.s32 %s10, 2
      // Predicated region
      $region45: #{tpu_custom_call.1} parent=43 // pred_check
        %p1634 = pneg %p138
      $region46: #{tpu_custom_call.1} parent=43 // pred_check_branch
        %1636 = sbr.rel (%p1634) target = $region48
      $region47: #{tpu_custom_call.1} parent=43 // pred_region
        %s1637 = smul.u32 16, %s16
        %p1638 = scmp.lt.s32.totalorder %s1637, 31
        %s1639 = scalar_select %p1638, %s1637, 31
        %s1640 = smul.addr %s1639, 2
        %s1641 = smul.addr %s1640, 8
        %s1642 = scalar_lea.vmem %s4, %s1641
      $region48: #{tpu_custom_call.1} parent=43 // pred_fallthru
        _
    $region44: #{tpu_custom_call.1} parent=5 // pred_fallthru
      _
  $region6: #{tpu_custom_call.1} parent=0 // loop_footer
    %s14 = sadd.s32 1, %s10
  $region7: #{tpu_custom_call.1} parent=0 // loop_footer_branch
    %9 = sbr.rel target = $region3
  $region8: #{tpu_custom_call.1} parent=0 // loop_exit
    _

</llo_original>
